<compile_context>
chip_gen: v7x
topology: tpu7x:2x2x1
jax: 0.10.0
libtpu: 0.0.40
codegen_flags: <defaults>
</compile_context>

<pallas_src>
import jax
import jax.numpy as jnp
from jax import lax
from jax.experimental import pallas as pl
from jax.experimental.pallas import tpu as pltpu


def lstm_kernel(x_ref, w_ih_ref, w_hh_ref, b_ref, h0_ref, c0_ref,
                fcw_ref, fcb_ref, out_ref, seq_ref, gx_ref):
    layer = pl.program_id(0)
    n_layers = pl.num_programs(0)

    T, B, H = seq_ref.shape
    G = 4 * H
    w_hh = w_hh_ref[0]                      # (H, 4H)
    bias = b_ref[0].reshape(1, 1, G)        # (1, 1, 4H), b_ih + b_hh folded

    # ---- per-layer input projection, hoisted out of the recurrence ----
    @pl.when(layer == 0)
    def _():
        # input_size == 1: gates_x = x * w_ih[row 0] + bias  (broadcast, no MXU)
        w0 = w_ih_ref[0][0:1, :].reshape(1, 1, G)
        gx_ref[...] = x_ref[...] * w0 + bias

    @pl.when(layer > 0)
    def _():
        # One (T*B, H) @ (H, 4H) matmul instead of T tiny (B, H) matmuls.
        seq2d = seq_ref[...].reshape(T * B, H)
        gx = jnp.dot(seq2d, w_ih_ref[0], preferred_element_type=jnp.float32)
        gx_ref[...] = gx.reshape(T, B, G) + bias

    # ---- recurrence: only h @ w_hh remains on the serial critical path ----
    def step(t, carry):
        h, c = carry
        gates = (jnp.dot(h, w_hh, preferred_element_type=jnp.float32)
                 + gx_ref[t])               # (B, 4H)
        i_g = jax.nn.sigmoid(gates[:, 0 * H:1 * H])
        f_g = jax.nn.sigmoid(gates[:, 1 * H:2 * H])
        g_g = jnp.tanh(gates[:, 2 * H:3 * H])
        o_g = jax.nn.sigmoid(gates[:, 3 * H:4 * H])
        c_new = f_g * c + i_g * g_g
        h_new = o_g * jnp.tanh(c_new)
        seq_ref[t] = h_new                  # next layer reads this in place
        return h_new, c_new

    unroll = T if T <= 32 else 8            # short fixed loop -> full unroll
    h_fin, _ = lax.fori_loop(0, T, step, (h0_ref[0], c0_ref[0]), unroll=unroll)

    # Final layer: out[:, -1, :] == fc(h_T of the top layer).
    @pl.when(layer == n_layers - 1)
    def _():
        out_ref[...] = (jnp.dot(h_fin, fcw_ref[...],
                                preferred_element_type=jnp.float32)
                        + fcb_ref[...])


def lstm_forward(x, params, hidden_dim, output_dim, layer_num, h0, c0):
    """x: (B, T) float32 -> (B, output_dim) float32."""
    B, T = x.shape
    H, O, L = hidden_dim, output_dim, layer_num

    # Narrow time-major input (T, B, 1) -- no H-padded zero features.
    x_tm = x.T.reshape(T, B, 1).astype(jnp.float32)

    w_ih, w_hh, b, fc_w, fc_b = params

    out = pl.pallas_call(
        lstm_kernel,
        out_shape=jax.ShapeDtypeStruct((B, O), jnp.float32),
        grid_spec=pltpu.PrefetchScalarGridSpec(
            num_scalar_prefetch=0,
            grid=(L,),
            in_specs=[
                pl.BlockSpec((T, B, 1), lambda l: (0, 0, 0)),      # x (time-major)
                pl.BlockSpec((1, H, 4 * H), lambda l: (l, 0, 0)),  # w_ih
                pl.BlockSpec((1, H, 4 * H), lambda l: (l, 0, 0)),  # w_hh
                pl.BlockSpec((1, 1, 4 * H), lambda l: (l, 0, 0)),  # bias
                pl.BlockSpec((1, B, H), lambda l: (l, 0, 0)),      # h0
                pl.BlockSpec((1, B, H), lambda l: (l, 0, 0)),      # c0
                pl.BlockSpec((H, O), lambda l: (0, 0)),            # fc_w
                pl.BlockSpec((1, O), lambda l: (0, 0)),            # fc_b
            ],
            out_specs=pl.BlockSpec((B, O), lambda l: (0, 0)),
            scratch_shapes=[
                pltpu.VMEM((T, B, H), jnp.float32),        # per-layer hidden sequence
                pltpu.VMEM((T, B, 4 * H), jnp.float32),    # hoisted gates_x
            ],
        ),
        compiler_params=pltpu.CompilerParams(
            dimension_semantics=("arbitrary",)),
    )(x_tm, w_ih, w_hh, b, h0, c0, fc_w, fc_b)
    return out


def init_params(key, hidden_dim, output_dim, layer_num):
    """Deterministic synthetic parameters mirroring nn.LSTM/Linear shapes."""
    H, O, L = hidden_dim, output_dim, layer_num
    scale = 1.0 / jnp.sqrt(jnp.float32(H))
    keys = jax.random.split(key, 4 * L + 2)

    w_ih_list, w_hh_list, b_list = [], [], []
    for l in range(L):
        in_dim = 1 if l == 0 else H
        k_wi, k_wh, k_bi, k_bh = keys[4 * l:4 * l + 4]
        # torch layout: weight_ih (4H, in_dim), weight_hh (4H, H); gate order i,f,g,o.
        wi = jax.random.uniform(k_wi, (4 * H, in_dim), jnp.float32, -scale, scale)
        wh = jax.random.uniform(k_wh, (4 * H, H), jnp.float32, -scale, scale)
        bi = jax.random.uniform(k_bi, (4 * H,), jnp.float32, -scale, scale)
        bh = jax.random.uniform(k_bh, (4 * H,), jnp.float32, -scale, scale)
        # Transpose for x @ W; layer-0 (in_dim=1) rows zero-padded to H for uniform
        # stacking (kernel only reads row 0 at layer 0).
        wi_t = jnp.zeros((H, 4 * H), jnp.float32).at[:in_dim, :].set(wi.T)
        w_ih_list.append(wi_t)
        w_hh_list.append(wh.T)
        b_list.append((bi + bh).reshape(1, 4 * H))

    w_ih = jnp.stack(w_ih_list)            # (L, H, 4H)
    w_hh = jnp.stack(w_hh_list)            # (L, H, 4H)
    b = jnp.stack(b_list)                  # (L, 1, 4H)

    k_fw, k_fb = keys[4 * L:4 * L + 2]
    fscale = 1.0 / jnp.sqrt(jnp.float32(H))
    fc_w = jax.random.uniform(k_fw, (H, O), jnp.float32, -fscale, fscale)
    fc_b = jax.random.uniform(k_fb, (1, O), jnp.float32, -fscale, fscale)
    return (w_ih, w_hh, b, fc_w, fc_b)


if __name__ == "__main__":
    hidden_dim = 32
    output_dim = 8
    layer_num = 2
    batch = 2
    seq_len = 8

    key = jax.random.PRNGKey(0)
    k_x, k_p, k_h, k_c = jax.random.split(key, 4)

    x = jax.random.normal(k_x, (batch, seq_len), jnp.float32)
    params = init_params(k_p, hidden_dim, output_dim, layer_num)
    # torch.randn h0/c0 are drawn fresh each forward; here generated deterministically.
    h0 = jax.random.normal(k_h, (layer_num, batch, hidden_dim), jnp.float32)
    c0 = jax.random.normal(k_c, (layer_num, batch, hidden_dim), jnp.float32)

    out = lstm_forward(x, params, hidden_dim, output_dim, layer_num, h0, c0)
    out = jax.block_until_ready(out)
    assert out.shape == (batch, output_dim)
    assert bool(jnp.all(jnp.isfinite(out)))
    print("KERNEL_OK")
</pallas_src>

<mosaic_0001>
module attributes {stable_mosaic.version = 11 : i64} {
  func.func @lstm_kernel(%arg0: i32, %arg1: memref<8x2x1xf32, #tpu.memory_space<vmem>>, %arg2: memref<1x32x128xf32, #tpu.memory_space<vmem>>, %arg3: memref<1x32x128xf32, #tpu.memory_space<vmem>>, %arg4: memref<1x1x128xf32, #tpu.memory_space<vmem>>, %arg5: memref<1x2x32xf32, #tpu.memory_space<vmem>>, %arg6: memref<1x2x32xf32, #tpu.memory_space<vmem>>, %arg7: memref<32x8xf32, #tpu.memory_space<vmem>>, %arg8: memref<1x8xf32, #tpu.memory_space<vmem>>, %arg9: memref<2x8xf32, #tpu.memory_space<vmem>>, %arg10: memref<8x2x32xf32, #tpu.memory_space<vmem>>, %arg11: memref<8x2x128xf32, #tpu.memory_space<vmem>>) attributes {dimension_semantics = [#tpu.dimension_semantics<arbitrary>], iteration_bounds = array<i64: 2>, scalar_prefetch = 0 : i64, scratch_operands = 2 : i64, tpu.core_type = #tpu.core_type<tc>, window_params = [{pipeline_mode = #tpu.pipeline_mode<synchronous>, transform_indices = @transform_0, window_bounds = array<i64: 8, 2, 1>}, {transform_indices = @transform_1, window_bounds = array<i64: 1, 32, 128>}, {transform_indices = @transform_2, window_bounds = array<i64: 1, 32, 128>}, {transform_indices = @transform_3, window_bounds = array<i64: 1, 1, 128>}, {transform_indices = @transform_4, window_bounds = array<i64: 1, 2, 32>}, {transform_indices = @transform_5, window_bounds = array<i64: 1, 2, 32>}, {pipeline_mode = #tpu.pipeline_mode<synchronous>, transform_indices = @transform_6, window_bounds = array<i64: 32, 8>}, {pipeline_mode = #tpu.pipeline_mode<synchronous>, transform_indices = @transform_7, window_bounds = array<i64: 1, 8>}, {pipeline_mode = #tpu.pipeline_mode<synchronous>, transform_indices = @transform_8, window_bounds = array<i64: 2, 8>}]} {
    %c0 = arith.constant 0 : index
    %c0_0 = arith.constant 0 : index
    %c0_1 = arith.constant 0 : index
    %0 = vector.load %arg3[%c0, %c0_0, %c0_1] : memref<1x32x128xf32, #tpu.memory_space<vmem>>, vector<1x32x128xf32>
    %1 = vector.shape_cast %0 : vector<1x32x128xf32> to vector<32x128xf32>
    %c0_2 = arith.constant 0 : index
    %c0_3 = arith.constant 0 : index
    %c0_4 = arith.constant 0 : index
    %2 = vector.load %arg4[%c0_2, %c0_3, %c0_4] : memref<1x1x128xf32, #tpu.memory_space<vmem>>, vector<1x1x128xf32>
    %3 = vector.shape_cast %2 : vector<1x1x128xf32> to vector<1x128xf32>
    %4 = vector.shape_cast %3 : vector<1x128xf32> to vector<1x1x128xf32>
    %c0_i32 = arith.constant 0 : i32
    %5 = arith.cmpi eq, %arg0, %c0_i32 : i32
    %6 = arith.extui %5 : i1 to i32
    %c0_i32_5 = arith.constant 0 : i32
    %7 = arith.cmpi ne, %6, %c0_i32_5 : i32
    scf.if %7 {
      %c0_80 = arith.constant 0 : index
      %c0_81 = arith.constant 0 : index
      %c0_82 = arith.constant 0 : index
      %290 = vector.load %arg2[%c0_80, %c0_81, %c0_82] : memref<1x32x128xf32, #tpu.memory_space<vmem>>, vector<1x32x128xf32>
      %291 = vector.shape_cast %290 : vector<1x32x128xf32> to vector<32x128xf32>
      %292 = vector.extract_strided_slice %291 {offsets = [0, 0], sizes = [1, 128], strides = [1, 1]} : vector<32x128xf32> to vector<1x128xf32>
      %293 = vector.shape_cast %292 : vector<1x128xf32> to vector<1x1x128xf32>
      %c0_83 = arith.constant 0 : index
      %c0_84 = arith.constant 0 : index
      %c0_85 = arith.constant 0 : index
      %294 = vector.load %arg1[%c0_83, %c0_84, %c0_85] : memref<8x2x1xf32, #tpu.memory_space<vmem>>, vector<8x2x1xf32>
      %295 = vector.broadcast %294 : vector<8x2x1xf32> to vector<8x2x128xf32>
      %296 = vector.broadcast %293 : vector<1x1x128xf32> to vector<8x2x128xf32>
      %297 = arith.mulf %295, %296 : vector<8x2x128xf32>
      %298 = vector.broadcast %4 : vector<1x1x128xf32> to vector<8x2x128xf32>
      %299 = arith.addf %297, %298 : vector<8x2x128xf32>
      %c0_86 = arith.constant 0 : index
      %c0_87 = arith.constant 0 : index
      %c0_88 = arith.constant 0 : index
      %300 = vector.load %arg11[%c0_86, %c0_87, %c0_88] : memref<8x2x128xf32, #tpu.memory_space<vmem>>, vector<8x2x128xf32>
      tpu.vector_store %arg11[%c0_86, %c0_87, %c0_88], %299 {strides = array<i32>} : memref<8x2x128xf32, #tpu.memory_space<vmem>>, vector<8x2x128xf32>,
    } else {
    }
    %c0_i32_6 = arith.constant 0 : i32
    %8 = arith.cmpi sgt, %arg0, %c0_i32_6 : i32
    %9 = arith.extui %8 : i1 to i32
    %c0_i32_7 = arith.constant 0 : i32
    %10 = arith.cmpi ne, %9, %c0_i32_7 : i32
    scf.if %10 {
      %c0_80 = arith.constant 0 : index
      %c0_81 = arith.constant 0 : index
      %c0_82 = arith.constant 0 : index
      %290 = vector.load %arg10[%c0_80, %c0_81, %c0_82] : memref<8x2x32xf32, #tpu.memory_space<vmem>>, vector<8x2x32xf32>
      %291 = vector.shape_cast %290 : vector<8x2x32xf32> to vector<16x32xf32>
      %c0_83 = arith.constant 0 : index
      %c0_84 = arith.constant 0 : index
      %c0_85 = arith.constant 0 : index
      %292 = vector.load %arg2[%c0_83, %c0_84, %c0_85] : memref<1x32x128xf32, #tpu.memory_space<vmem>>, vector<1x32x128xf32>
      %293 = vector.shape_cast %292 : vector<1x32x128xf32> to vector<32x128xf32>
      %cst_86 = arith.constant dense<0.000000e+00> : vector<16x128xf32>
      %294 = tpu.matmul %291, %293, %cst_86 {dimension_numbers = #tpu.dot_dimension_numbers<[1], [0], [0], [1], [0, 0, 1, 1], [], []>} : vector<16x32xf32>, vector<32x128xf32>, vector<16x128xf32> -> vector<16x128xf32>
      %295 = vector.shape_cast %294 : vector<16x128xf32> to vector<8x2x128xf32>
      %296 = vector.broadcast %4 : vector<1x1x128xf32> to vector<8x2x128xf32>
      %297 = arith.addf %295, %296 : vector<8x2x128xf32>
      %c0_87 = arith.constant 0 : index
      %c0_88 = arith.constant 0 : index
      %c0_89 = arith.constant 0 : index
      %298 = vector.load %arg11[%c0_87, %c0_88, %c0_89] : memref<8x2x128xf32, #tpu.memory_space<vmem>>, vector<8x2x128xf32>
      tpu.vector_store %arg11[%c0_87, %c0_88, %c0_89], %297 {strides = array<i32>} : memref<8x2x128xf32, #tpu.memory_space<vmem>>, vector<8x2x128xf32>,
    } else {
    }
    %c0_8 = arith.constant 0 : index
    %c0_9 = arith.constant 0 : index
    %c0_10 = arith.constant 0 : index
    %11 = vector.load %arg5[%c0_8, %c0_9, %c0_10] : memref<1x2x32xf32, #tpu.memory_space<vmem>>, vector<1x2x32xf32>
    %12 = vector.shape_cast %11 : vector<1x2x32xf32> to vector<2x32xf32>
    %c0_11 = arith.constant 0 : index
    %c0_12 = arith.constant 0 : index
    %c0_13 = arith.constant 0 : index
    %13 = vector.load %arg6[%c0_11, %c0_12, %c0_13] : memref<1x2x32xf32, #tpu.memory_space<vmem>>, vector<1x2x32xf32>
    %14 = vector.shape_cast %13 : vector<1x2x32xf32> to vector<2x32xf32>
    %c0_i32_14 = arith.constant 0 : i32
    %cst = arith.constant dense<0.000000e+00> : vector<2x128xf32>
    %15 = tpu.matmul %12, %1, %cst {dimension_numbers = #tpu.dot_dimension_numbers<[1], [0], [0], [1], [0, 0, 1, 1], [], []>} : vector<2x32xf32>, vector<32x128xf32>, vector<2x128xf32> -> vector<2x128xf32>
    %16 = arith.index_cast %c0_i32_14 : i32 to index
    %c0_15 = arith.constant 0 : index
    %c0_16 = arith.constant 0 : index
    %17 = vector.load %arg11[%16, %c0_15, %c0_16] : memref<8x2x128xf32, #tpu.memory_space<vmem>>, vector<1x2x128xf32>
    %18 = vector.shape_cast %17 : vector<1x2x128xf32> to vector<2x128xf32>
    %19 = arith.addf %15, %18 : vector<2x128xf32>
    %20 = vector.extract_strided_slice %19 {offsets = [0, 0], sizes = [2, 32], strides = [1, 1]} : vector<2x128xf32> to vector<2x32xf32>
    %21 = arith.negf %20 : vector<2x32xf32>
    %22 = math.exp %21 : vector<2x32xf32>
    %cst_17 = arith.constant 1.000000e+00 : f32
    %23 = vector.broadcast %cst_17 : f32 to vector<2x32xf32>
    %24 = arith.addf %23, %22 : vector<2x32xf32>
    %25 = arith.divf %23, %24 : vector<2x32xf32>
    %26 = vector.extract_strided_slice %19 {offsets = [0, 32], sizes = [2, 32], strides = [1, 1]} : vector<2x128xf32> to vector<2x32xf32>
    %27 = arith.negf %26 : vector<2x32xf32>
    %28 = math.exp %27 : vector<2x32xf32>
    %cst_18 = arith.constant 1.000000e+00 : f32
    %29 = vector.broadcast %cst_18 : f32 to vector<2x32xf32>
    %30 = arith.addf %29, %28 : vector<2x32xf32>
    %31 = arith.divf %29, %30 : vector<2x32xf32>
    %32 = vector.extract_strided_slice %19 {offsets = [0, 64], sizes = [2, 32], strides = [1, 1]} : vector<2x128xf32> to vector<2x32xf32>
    %33 = math.tanh %32 : vector<2x32xf32>
    %34 = vector.extract_strided_slice %19 {offsets = [0, 96], sizes = [2, 32], strides = [1, 1]} : vector<2x128xf32> to vector<2x32xf32>
    %35 = arith.negf %34 : vector<2x32xf32>
    %36 = math.exp %35 : vector<2x32xf32>
    %cst_19 = arith.constant 1.000000e+00 : f32
    %37 = vector.broadcast %cst_19 : f32 to vector<2x32xf32>
    %38 = arith.addf %37, %36 : vector<2x32xf32>
    %39 = arith.divf %37, %38 : vector<2x32xf32>
    %40 = arith.mulf %31, %14 : vector<2x32xf32>
    %41 = arith.mulf %25, %33 : vector<2x32xf32>
    %42 = arith.addf %40, %41 : vector<2x32xf32>
    %43 = math.tanh %42 : vector<2x32xf32>
    %44 = arith.mulf %39, %43 : vector<2x32xf32>
    %45 = arith.index_cast %c0_i32_14 : i32 to index
    %c0_20 = arith.constant 0 : index
    %c0_21 = arith.constant 0 : index
    %46 = vector.load %arg10[%45, %c0_20, %c0_21] : memref<8x2x32xf32, #tpu.memory_space<vmem>>, vector<1x2x32xf32>
    %47 = vector.shape_cast %46 : vector<1x2x32xf32> to vector<2x32xf32>
    %48 = vector.shape_cast %44 : vector<2x32xf32> to vector<1x2x32xf32>
    tpu.vector_store %arg10[%45, %c0_20, %c0_21], %48 {strides = array<i32>} : memref<8x2x32xf32, #tpu.memory_space<vmem>>, vector<1x2x32xf32>,
    %c1_i32 = arith.constant 1 : i32
    %cst_22 = arith.constant dense<0.000000e+00> : vector<2x128xf32>
    %49 = tpu.matmul %44, %1, %cst_22 {dimension_numbers = #tpu.dot_dimension_numbers<[1], [0], [0], [1], [0, 0, 1, 1], [], []>} : vector<2x32xf32>, vector<32x128xf32>, vector<2x128xf32> -> vector<2x128xf32>
    %50 = arith.index_cast %c1_i32 : i32 to index
    %c0_23 = arith.constant 0 : index
    %c0_24 = arith.constant 0 : index
    %51 = vector.load %arg11[%50, %c0_23, %c0_24] : memref<8x2x128xf32, #tpu.memory_space<vmem>>, vector<1x2x128xf32>
    %52 = vector.shape_cast %51 : vector<1x2x128xf32> to vector<2x128xf32>
    %53 = arith.addf %49, %52 : vector<2x128xf32>
    %54 = vector.extract_strided_slice %53 {offsets = [0, 0], sizes = [2, 32], strides = [1, 1]} : vector<2x128xf32> to vector<2x32xf32>
    %55 = arith.negf %54 : vector<2x32xf32>
    %56 = math.exp %55 : vector<2x32xf32>
    %cst_25 = arith.constant 1.000000e+00 : f32
    %57 = vector.broadcast %cst_25 : f32 to vector<2x32xf32>
    %58 = arith.addf %57, %56 : vector<2x32xf32>
    %59 = arith.divf %57, %58 : vector<2x32xf32>
    %60 = vector.extract_strided_slice %53 {offsets = [0, 32], sizes = [2, 32], strides = [1, 1]} : vector<2x128xf32> to vector<2x32xf32>
    %61 = arith.negf %60 : vector<2x32xf32>
    %62 = math.exp %61 : vector<2x32xf32>
    %cst_26 = arith.constant 1.000000e+00 : f32
    %63 = vector.broadcast %cst_26 : f32 to vector<2x32xf32>
    %64 = arith.addf %63, %62 : vector<2x32xf32>
    %65 = arith.divf %63, %64 : vector<2x32xf32>
    %66 = vector.extract_strided_slice %53 {offsets = [0, 64], sizes = [2, 32], strides = [1, 1]} : vector<2x128xf32> to vector<2x32xf32>
    %67 = math.tanh %66 : vector<2x32xf32>
    %68 = vector.extract_strided_slice %53 {offsets = [0, 96], sizes = [2, 32], strides = [1, 1]} : vector<2x128xf32> to vector<2x32xf32>
    %69 = arith.negf %68 : vector<2x32xf32>
    %70 = math.exp %69 : vector<2x32xf32>
    %cst_27 = arith.constant 1.000000e+00 : f32
    %71 = vector.broadcast %cst_27 : f32 to vector<2x32xf32>
    %72 = arith.addf %71, %70 : vector<2x32xf32>
    %73 = arith.divf %71, %72 : vector<2x32xf32>
    %74 = arith.mulf %65, %42 : vector<2x32xf32>
    %75 = arith.mulf %59, %67 : vector<2x32xf32>
    %76 = arith.addf %74, %75 : vector<2x32xf32>
    %77 = math.tanh %76 : vector<2x32xf32>
    %78 = arith.mulf %73, %77 : vector<2x32xf32>
    %79 = arith.index_cast %c1_i32 : i32 to index
    %c0_28 = arith.constant 0 : index
    %c0_29 = arith.constant 0 : index
    %80 = vector.load %arg10[%79, %c0_28, %c0_29] : memref<8x2x32xf32, #tpu.memory_space<vmem>>, vector<1x2x32xf32>
    %81 = vector.shape_cast %80 : vector<1x2x32xf32> to vector<2x32xf32>
    %82 = vector.shape_cast %78 : vector<2x32xf32> to vector<1x2x32xf32>
    tpu.vector_store %arg10[%79, %c0_28, %c0_29], %82 {strides = array<i32>} : memref<8x2x32xf32, #tpu.memory_space<vmem>>, vector<1x2x32xf32>,
    %c2_i32 = arith.constant 2 : i32
    %cst_30 = arith.constant dense<0.000000e+00> : vector<2x128xf32>
    %83 = tpu.matmul %78, %1, %cst_30 {dimension_numbers = #tpu.dot_dimension_numbers<[1], [0], [0], [1], [0, 0, 1, 1], [], []>} : vector<2x32xf32>, vector<32x128xf32>, vector<2x128xf32> -> vector<2x128xf32>
    %84 = arith.index_cast %c2_i32 : i32 to index
    %c0_31 = arith.constant 0 : index
    %c0_32 = arith.constant 0 : index
    %85 = vector.load %arg11[%84, %c0_31, %c0_32] : memref<8x2x128xf32, #tpu.memory_space<vmem>>, vector<1x2x128xf32>
    %86 = vector.shape_cast %85 : vector<1x2x128xf32> to vector<2x128xf32>
    %87 = arith.addf %83, %86 : vector<2x128xf32>
    %88 = vector.extract_strided_slice %87 {offsets = [0, 0], sizes = [2, 32], strides = [1, 1]} : vector<2x128xf32> to vector<2x32xf32>
    %89 = arith.negf %88 : vector<2x32xf32>
    %90 = math.exp %89 : vector<2x32xf32>
    %cst_33 = arith.constant 1.000000e+00 : f32
    %91 = vector.broadcast %cst_33 : f32 to vector<2x32xf32>
    %92 = arith.addf %91, %90 : vector<2x32xf32>
    %93 = arith.divf %91, %92 : vector<2x32xf32>
    %94 = vector.extract_strided_slice %87 {offsets = [0, 32], sizes = [2, 32], strides = [1, 1]} : vector<2x128xf32> to vector<2x32xf32>
    %95 = arith.negf %94 : vector<2x32xf32>
    %96 = math.exp %95 : vector<2x32xf32>
    %cst_34 = arith.constant 1.000000e+00 : f32
    %97 = vector.broadcast %cst_34 : f32 to vector<2x32xf32>
    %98 = arith.addf %97, %96 : vector<2x32xf32>
    %99 = arith.divf %97, %98 : vector<2x32xf32>
    %100 = vector.extract_strided_slice %87 {offsets = [0, 64], sizes = [2, 32], strides = [1, 1]} : vector<2x128xf32> to vector<2x32xf32>
    %101 = math.tanh %100 : vector<2x32xf32>
    %102 = vector.extract_strided_slice %87 {offsets = [0, 96], sizes = [2, 32], strides = [1, 1]} : vector<2x128xf32> to vector<2x32xf32>
    %103 = arith.negf %102 : vector<2x32xf32>
    %104 = math.exp %103 : vector<2x32xf32>
    %cst_35 = arith.constant 1.000000e+00 : f32
    %105 = vector.broadcast %cst_35 : f32 to vector<2x32xf32>
    %106 = arith.addf %105, %104 : vector<2x32xf32>
    %107 = arith.divf %105, %106 : vector<2x32xf32>
    %108 = arith.mulf %99, %76 : vector<2x32xf32>
    %109 = arith.mulf %93, %101 : vector<2x32xf32>
    %110 = arith.addf %108, %109 : vector<2x32xf32>
    %111 = math.tanh %110 : vector<2x32xf32>
    %112 = arith.mulf %107, %111 : vector<2x32xf32>
    %113 = arith.index_cast %c2_i32 : i32 to index
    %c0_36 = arith.constant 0 : index
    %c0_37 = arith.constant 0 : index
    %114 = vector.load %arg10[%113, %c0_36, %c0_37] : memref<8x2x32xf32, #tpu.memory_space<vmem>>, vector<1x2x32xf32>
    %115 = vector.shape_cast %114 : vector<1x2x32xf32> to vector<2x32xf32>
    %116 = vector.shape_cast %112 : vector<2x32xf32> to vector<1x2x32xf32>
    tpu.vector_store %arg10[%113, %c0_36, %c0_37], %116 {strides = array<i32>} : memref<8x2x32xf32, #tpu.memory_space<vmem>>, vector<1x2x32xf32>,
    %c3_i32 = arith.constant 3 : i32
    %cst_38 = arith.constant dense<0.000000e+00> : vector<2x128xf32>
    %117 = tpu.matmul %112, %1, %cst_38 {dimension_numbers = #tpu.dot_dimension_numbers<[1], [0], [0], [1], [0, 0, 1, 1], [], []>} : vector<2x32xf32>, vector<32x128xf32>, vector<2x128xf32> -> vector<2x128xf32>
    %118 = arith.index_cast %c3_i32 : i32 to index
    %c0_39 = arith.constant 0 : index
    %c0_40 = arith.constant 0 : index
    %119 = vector.load %arg11[%118, %c0_39, %c0_40] : memref<8x2x128xf32, #tpu.memory_space<vmem>>, vector<1x2x128xf32>
    %120 = vector.shape_cast %119 : vector<1x2x128xf32> to vector<2x128xf32>
    %121 = arith.addf %117, %120 : vector<2x128xf32>
    %122 = vector.extract_strided_slice %121 {offsets = [0, 0], sizes = [2, 32], strides = [1, 1]} : vector<2x128xf32> to vector<2x32xf32>
    %123 = arith.negf %122 : vector<2x32xf32>
    %124 = math.exp %123 : vector<2x32xf32>
    %cst_41 = arith.constant 1.000000e+00 : f32
    %125 = vector.broadcast %cst_41 : f32 to vector<2x32xf32>
    %126 = arith.addf %125, %124 : vector<2x32xf32>
    %127 = arith.divf %125, %126 : vector<2x32xf32>
    %128 = vector.extract_strided_slice %121 {offsets = [0, 32], sizes = [2, 32], strides = [1, 1]} : vector<2x128xf32> to vector<2x32xf32>
    %129 = arith.negf %128 : vector<2x32xf32>
    %130 = math.exp %129 : vector<2x32xf32>
    %cst_42 = arith.constant 1.000000e+00 : f32
    %131 = vector.broadcast %cst_42 : f32 to vector<2x32xf32>
    %132 = arith.addf %131, %130 : vector<2x32xf32>
    %133 = arith.divf %131, %132 : vector<2x32xf32>
    %134 = vector.extract_strided_slice %121 {offsets = [0, 64], sizes = [2, 32], strides = [1, 1]} : vector<2x128xf32> to vector<2x32xf32>
    %135 = math.tanh %134 : vector<2x32xf32>
    %136 = vector.extract_strided_slice %121 {offsets = [0, 96], sizes = [2, 32], strides = [1, 1]} : vector<2x128xf32> to vector<2x32xf32>
    %137 = arith.negf %136 : vector<2x32xf32>
    %138 = math.exp %137 : vector<2x32xf32>
    %cst_43 = arith.constant 1.000000e+00 : f32
    %139 = vector.broadcast %cst_43 : f32 to vector<2x32xf32>
    %140 = arith.addf %139, %138 : vector<2x32xf32>
    %141 = arith.divf %139, %140 : vector<2x32xf32>
    %142 = arith.mulf %133, %110 : vector<2x32xf32>
    %143 = arith.mulf %127, %135 : vector<2x32xf32>
    %144 = arith.addf %142, %143 : vector<2x32xf32>
    %145 = math.tanh %144 : vector<2x32xf32>
    %146 = arith.mulf %141, %145 : vector<2x32xf32>
    %147 = arith.index_cast %c3_i32 : i32 to index
    %c0_44 = arith.constant 0 : index
    %c0_45 = arith.constant 0 : index
    %148 = vector.load %arg10[%147, %c0_44, %c0_45] : memref<8x2x32xf32, #tpu.memory_space<vmem>>, vector<1x2x32xf32>
    %149 = vector.shape_cast %148 : vector<1x2x32xf32> to vector<2x32xf32>
    %150 = vector.shape_cast %146 : vector<2x32xf32> to vector<1x2x32xf32>
    tpu.vector_store %arg10[%147, %c0_44, %c0_45], %150 {strides = array<i32>} : memref<8x2x32xf32, #tpu.memory_space<vmem>>, vector<1x2x32xf32>,
    %c4_i32 = arith.constant 4 : i32
    %cst_46 = arith.constant dense<0.000000e+00> : vector<2x128xf32>
    %151 = tpu.matmul %146, %1, %cst_46 {dimension_numbers = #tpu.dot_dimension_numbers<[1], [0], [0], [1], [0, 0, 1, 1], [], []>} : vector<2x32xf32>, vector<32x128xf32>, vector<2x128xf32> -> vector<2x128xf32>
    %152 = arith.index_cast %c4_i32 : i32 to index
    %c0_47 = arith.constant 0 : index
    %c0_48 = arith.constant 0 : index
    %153 = vector.load %arg11[%152, %c0_47, %c0_48] : memref<8x2x128xf32, #tpu.memory_space<vmem>>, vector<1x2x128xf32>
    %154 = vector.shape_cast %153 : vector<1x2x128xf32> to vector<2x128xf32>
    %155 = arith.addf %151, %154 : vector<2x128xf32>
    %156 = vector.extract_strided_slice %155 {offsets = [0, 0], sizes = [2, 32], strides = [1, 1]} : vector<2x128xf32> to vector<2x32xf32>
    %157 = arith.negf %156 : vector<2x32xf32>
    %158 = math.exp %157 : vector<2x32xf32>
    %cst_49 = arith.constant 1.000000e+00 : f32
    %159 = vector.broadcast %cst_49 : f32 to vector<2x32xf32>
    %160 = arith.addf %159, %158 : vector<2x32xf32>
    %161 = arith.divf %159, %160 : vector<2x32xf32>
    %162 = vector.extract_strided_slice %155 {offsets = [0, 32], sizes = [2, 32], strides = [1, 1]} : vector<2x128xf32> to vector<2x32xf32>
    %163 = arith.negf %162 : vector<2x32xf32>
    %164 = math.exp %163 : vector<2x32xf32>
    %cst_50 = arith.constant 1.000000e+00 : f32
    %165 = vector.broadcast %cst_50 : f32 to vector<2x32xf32>
    %166 = arith.addf %165, %164 : vector<2x32xf32>
    %167 = arith.divf %165, %166 : vector<2x32xf32>
    %168 = vector.extract_strided_slice %155 {offsets = [0, 64], sizes = [2, 32], strides = [1, 1]} : vector<2x128xf32> to vector<2x32xf32>
    %169 = math.tanh %168 : vector<2x32xf32>
    %170 = vector.extract_strided_slice %155 {offsets = [0, 96], sizes = [2, 32], strides = [1, 1]} : vector<2x128xf32> to vector<2x32xf32>
    %171 = arith.negf %170 : vector<2x32xf32>
    %172 = math.exp %171 : vector<2x32xf32>
    %cst_51 = arith.constant 1.000000e+00 : f32
    %173 = vector.broadcast %cst_51 : f32 to vector<2x32xf32>
    %174 = arith.addf %173, %172 : vector<2x32xf32>
    %175 = arith.divf %173, %174 : vector<2x32xf32>
    %176 = arith.mulf %167, %144 : vector<2x32xf32>
    %177 = arith.mulf %161, %169 : vector<2x32xf32>
    %178 = arith.addf %176, %177 : vector<2x32xf32>
    %179 = math.tanh %178 : vector<2x32xf32>
    %180 = arith.mulf %175, %179 : vector<2x32xf32>
    %181 = arith.index_cast %c4_i32 : i32 to index
    %c0_52 = arith.constant 0 : index
    %c0_53 = arith.constant 0 : index
    %182 = vector.load %arg10[%181, %c0_52, %c0_53] : memref<8x2x32xf32, #tpu.memory_space<vmem>>, vector<1x2x32xf32>
    %183 = vector.shape_cast %182 : vector<1x2x32xf32> to vector<2x32xf32>
    %184 = vector.shape_cast %180 : vector<2x32xf32> to vector<1x2x32xf32>
    tpu.vector_store %arg10[%181, %c0_52, %c0_53], %184 {strides = array<i32>} : memref<8x2x32xf32, #tpu.memory_space<vmem>>, vector<1x2x32xf32>,
    %c5_i32 = arith.constant 5 : i32
    %cst_54 = arith.constant dense<0.000000e+00> : vector<2x128xf32>
    %185 = tpu.matmul %180, %1, %cst_54 {dimension_numbers = #tpu.dot_dimension_numbers<[1], [0], [0], [1], [0, 0, 1, 1], [], []>} : vector<2x32xf32>, vector<32x128xf32>, vector<2x128xf32> -> vector<2x128xf32>
    %186 = arith.index_cast %c5_i32 : i32 to index
    %c0_55 = arith.constant 0 : index
    %c0_56 = arith.constant 0 : index
    %187 = vector.load %arg11[%186, %c0_55, %c0_56] : memref<8x2x128xf32, #tpu.memory_space<vmem>>, vector<1x2x128xf32>
    %188 = vector.shape_cast %187 : vector<1x2x128xf32> to vector<2x128xf32>
    %189 = arith.addf %185, %188 : vector<2x128xf32>
    %190 = vector.extract_strided_slice %189 {offsets = [0, 0], sizes = [2, 32], strides = [1, 1]} : vector<2x128xf32> to vector<2x32xf32>
    %191 = arith.negf %190 : vector<2x32xf32>
    %192 = math.exp %191 : vector<2x32xf32>
    %cst_57 = arith.constant 1.000000e+00 : f32
    %193 = vector.broadcast %cst_57 : f32 to vector<2x32xf32>
    %194 = arith.addf %193, %192 : vector<2x32xf32>
    %195 = arith.divf %193, %194 : vector<2x32xf32>
    %196 = vector.extract_strided_slice %189 {offsets = [0, 32], sizes = [2, 32], strides = [1, 1]} : vector<2x128xf32> to vector<2x32xf32>
    %197 = arith.negf %196 : vector<2x32xf32>
    %198 = math.exp %197 : vector<2x32xf32>
    %cst_58 = arith.constant 1.000000e+00 : f32
    %199 = vector.broadcast %cst_58 : f32 to vector<2x32xf32>
    %200 = arith.addf %199, %198 : vector<2x32xf32>
    %201 = arith.divf %199, %200 : vector<2x32xf32>
    %202 = vector.extract_strided_slice %189 {offsets = [0, 64], sizes = [2, 32], strides = [1, 1]} : vector<2x128xf32> to vector<2x32xf32>
    %203 = math.tanh %202 : vector<2x32xf32>
    %204 = vector.extract_strided_slice %189 {offsets = [0, 96], sizes = [2, 32], strides = [1, 1]} : vector<2x128xf32> to vector<2x32xf32>
    %205 = arith.negf %204 : vector<2x32xf32>
    %206 = math.exp %205 : vector<2x32xf32>
    %cst_59 = arith.constant 1.000000e+00 : f32
    %207 = vector.broadcast %cst_59 : f32 to vector<2x32xf32>
    %208 = arith.addf %207, %206 : vector<2x32xf32>
    %209 = arith.divf %207, %208 : vector<2x32xf32>
    %210 = arith.mulf %201, %178 : vector<2x32xf32>
    %211 = arith.mulf %195, %203 : vector<2x32xf32>
    %212 = arith.addf %210, %211 : vector<2x32xf32>
    %213 = math.tanh %212 : vector<2x32xf32>
    %214 = arith.mulf %209, %213 : vector<2x32xf32>
    %215 = arith.index_cast %c5_i32 : i32 to index
    %c0_60 = arith.constant 0 : index
    %c0_61 = arith.constant 0 : index
    %216 = vector.load %arg10[%215, %c0_60, %c0_61] : memref<8x2x32xf32, #tpu.memory_space<vmem>>, vector<1x2x32xf32>
    %217 = vector.shape_cast %216 : vector<1x2x32xf32> to vector<2x32xf32>
    %218 = vector.shape_cast %214 : vector<2x32xf32> to vector<1x2x32xf32>
    tpu.vector_store %arg10[%215, %c0_60, %c0_61], %218 {strides = array<i32>} : memref<8x2x32xf32, #tpu.memory_space<vmem>>, vector<1x2x32xf32>,
    %c6_i32 = arith.constant 6 : i32
    %cst_62 = arith.constant dense<0.000000e+00> : vector<2x128xf32>
    %219 = tpu.matmul %214, %1, %cst_62 {dimension_numbers = #tpu.dot_dimension_numbers<[1], [0], [0], [1], [0, 0, 1, 1], [], []>} : vector<2x32xf32>, vector<32x128xf32>, vector<2x128xf32> -> vector<2x128xf32>
    %220 = arith.index_cast %c6_i32 : i32 to index
    %c0_63 = arith.constant 0 : index
    %c0_64 = arith.constant 0 : index
    %221 = vector.load %arg11[%220, %c0_63, %c0_64] : memref<8x2x128xf32, #tpu.memory_space<vmem>>, vector<1x2x128xf32>
    %222 = vector.shape_cast %221 : vector<1x2x128xf32> to vector<2x128xf32>
    %223 = arith.addf %219, %222 : vector<2x128xf32>
    %224 = vector.extract_strided_slice %223 {offsets = [0, 0], sizes = [2, 32], strides = [1, 1]} : vector<2x128xf32> to vector<2x32xf32>
    %225 = arith.negf %224 : vector<2x32xf32>
    %226 = math.exp %225 : vector<2x32xf32>
    %cst_65 = arith.constant 1.000000e+00 : f32
    %227 = vector.broadcast %cst_65 : f32 to vector<2x32xf32>
    %228 = arith.addf %227, %226 : vector<2x32xf32>
    %229 = arith.divf %227, %228 : vector<2x32xf32>
    %230 = vector.extract_strided_slice %223 {offsets = [0, 32], sizes = [2, 32], strides = [1, 1]} : vector<2x128xf32> to vector<2x32xf32>
    %231 = arith.negf %230 : vector<2x32xf32>
    %232 = math.exp %231 : vector<2x32xf32>
    %cst_66 = arith.constant 1.000000e+00 : f32
    %233 = vector.broadcast %cst_66 : f32 to vector<2x32xf32>
    %234 = arith.addf %233, %232 : vector<2x32xf32>
    %235 = arith.divf %233, %234 : vector<2x32xf32>
    %236 = vector.extract_strided_slice %223 {offsets = [0, 64], sizes = [2, 32], strides = [1, 1]} : vector<2x128xf32> to vector<2x32xf32>
    %237 = math.tanh %236 : vector<2x32xf32>
    %238 = vector.extract_strided_slice %223 {offsets = [0, 96], sizes = [2, 32], strides = [1, 1]} : vector<2x128xf32> to vector<2x32xf32>
    %239 = arith.negf %238 : vector<2x32xf32>
    %240 = math.exp %239 : vector<2x32xf32>
    %cst_67 = arith.constant 1.000000e+00 : f32
    %241 = vector.broadcast %cst_67 : f32 to vector<2x32xf32>
    %242 = arith.addf %241, %240 : vector<2x32xf32>
    %243 = arith.divf %241, %242 : vector<2x32xf32>
    %244 = arith.mulf %235, %212 : vector<2x32xf32>
    %245 = arith.mulf %229, %237 : vector<2x32xf32>
    %246 = arith.addf %244, %245 : vector<2x32xf32>
    %247 = math.tanh %246 : vector<2x32xf32>
    %248 = arith.mulf %243, %247 : vector<2x32xf32>
    %249 = arith.index_cast %c6_i32 : i32 to index
    %c0_68 = arith.constant 0 : index
    %c0_69 = arith.constant 0 : index
    %250 = vector.load %arg10[%249, %c0_68, %c0_69] : memref<8x2x32xf32, #tpu.memory_space<vmem>>, vector<1x2x32xf32>
    %251 = vector.shape_cast %250 : vector<1x2x32xf32> to vector<2x32xf32>
    %252 = vector.shape_cast %248 : vector<2x32xf32> to vector<1x2x32xf32>
    tpu.vector_store %arg10[%249, %c0_68, %c0_69], %252 {strides = array<i32>} : memref<8x2x32xf32, #tpu.memory_space<vmem>>, vector<1x2x32xf32>,
    %c7_i32 = arith.constant 7 : i32
    %cst_70 = arith.constant dense<0.000000e+00> : vector<2x128xf32>
    %253 = tpu.matmul %248, %1, %cst_70 {dimension_numbers = #tpu.dot_dimension_numbers<[1], [0], [0], [1], [0, 0, 1, 1], [], []>} : vector<2x32xf32>, vector<32x128xf32>, vector<2x128xf32> -> vector<2x128xf32>
    %254 = arith.index_cast %c7_i32 : i32 to index
    %c0_71 = arith.constant 0 : index
    %c0_72 = arith.constant 0 : index
    %255 = vector.load %arg11[%254, %c0_71, %c0_72] : memref<8x2x128xf32, #tpu.memory_space<vmem>>, vector<1x2x128xf32>
    %256 = vector.shape_cast %255 : vector<1x2x128xf32> to vector<2x128xf32>
    %257 = arith.addf %253, %256 : vector<2x128xf32>
    %258 = vector.extract_strided_slice %257 {offsets = [0, 0], sizes = [2, 32], strides = [1, 1]} : vector<2x128xf32> to vector<2x32xf32>
    %259 = arith.negf %258 : vector<2x32xf32>
    %260 = math.exp %259 : vector<2x32xf32>
    %cst_73 = arith.constant 1.000000e+00 : f32
    %261 = vector.broadcast %cst_73 : f32 to vector<2x32xf32>
    %262 = arith.addf %261, %260 : vector<2x32xf32>
    %263 = arith.divf %261, %262 : vector<2x32xf32>
    %264 = vector.extract_strided_slice %257 {offsets = [0, 32], sizes = [2, 32], strides = [1, 1]} : vector<2x128xf32> to vector<2x32xf32>
    %265 = arith.negf %264 : vector<2x32xf32>
    %266 = math.exp %265 : vector<2x32xf32>
    %cst_74 = arith.constant 1.000000e+00 : f32
    %267 = vector.broadcast %cst_74 : f32 to vector<2x32xf32>
    %268 = arith.addf %267, %266 : vector<2x32xf32>
    %269 = arith.divf %267, %268 : vector<2x32xf32>
    %270 = vector.extract_strided_slice %257 {offsets = [0, 64], sizes = [2, 32], strides = [1, 1]} : vector<2x128xf32> to vector<2x32xf32>
    %271 = math.tanh %270 : vector<2x32xf32>
    %272 = vector.extract_strided_slice %257 {offsets = [0, 96], sizes = [2, 32], strides = [1, 1]} : vector<2x128xf32> to vector<2x32xf32>
    %273 = arith.negf %272 : vector<2x32xf32>
    %274 = math.exp %273 : vector<2x32xf32>
    %cst_75 = arith.constant 1.000000e+00 : f32
    %275 = vector.broadcast %cst_75 : f32 to vector<2x32xf32>
    %276 = arith.addf %275, %274 : vector<2x32xf32>
    %277 = arith.divf %275, %276 : vector<2x32xf32>
    %278 = arith.mulf %269, %246 : vector<2x32xf32>
    %279 = arith.mulf %263, %271 : vector<2x32xf32>
    %280 = arith.addf %278, %279 : vector<2x32xf32>
    %281 = math.tanh %280 : vector<2x32xf32>
    %282 = arith.mulf %277, %281 : vector<2x32xf32>
    %283 = arith.index_cast %c7_i32 : i32 to index
    %c0_76 = arith.constant 0 : index
    %c0_77 = arith.constant 0 : index
    %284 = vector.load %arg10[%283, %c0_76, %c0_77] : memref<8x2x32xf32, #tpu.memory_space<vmem>>, vector<1x2x32xf32>
    %285 = vector.shape_cast %284 : vector<1x2x32xf32> to vector<2x32xf32>
    %286 = vector.shape_cast %282 : vector<2x32xf32> to vector<1x2x32xf32>
    tpu.vector_store %arg10[%283, %c0_76, %c0_77], %286 {strides = array<i32>} : memref<8x2x32xf32, #tpu.memory_space<vmem>>, vector<1x2x32xf32>,
    %c8_i32 = arith.constant 8 : i32
    %c1_i32_78 = arith.constant 1 : i32
    %287 = arith.cmpi eq, %arg0, %c1_i32_78 : i32
    %288 = arith.extui %287 : i1 to i32
    %c0_i32_79 = arith.constant 0 : i32
    %289 = arith.cmpi ne, %288, %c0_i32_79 : i32
    scf.if %289 {
      %c0_80 = arith.constant 0 : index
      %c0_81 = arith.constant 0 : index
      %290 = vector.load %arg7[%c0_80, %c0_81] : memref<32x8xf32, #tpu.memory_space<vmem>>, vector<32x8xf32>
      %cst_82 = arith.constant dense<0.000000e+00> : vector<2x8xf32>
      %291 = tpu.matmul %282, %290, %cst_82 {dimension_numbers = #tpu.dot_dimension_numbers<[1], [0], [0], [1], [0, 0, 1, 1], [], []>} : vector<2x32xf32>, vector<32x8xf32>, vector<2x8xf32> -> vector<2x8xf32>
      %c0_83 = arith.constant 0 : index
      %c0_84 = arith.constant 0 : index
      %292 = vector.load %arg8[%c0_83, %c0_84] : memref<1x8xf32, #tpu.memory_space<vmem>>, vector<1x8xf32>
      %293 = vector.broadcast %292 : vector<1x8xf32> to vector<2x8xf32>
      %294 = arith.addf %291, %293 : vector<2x8xf32>
      %c0_85 = arith.constant 0 : index
      %c0_86 = arith.constant 0 : index
      %295 = vector.load %arg9[%c0_85, %c0_86] : memref<2x8xf32, #tpu.memory_space<vmem>>, vector<2x8xf32>
      tpu.vector_store %arg9[%c0_85, %c0_86], %294 {strides = array<i32>} : memref<2x8xf32, #tpu.memory_space<vmem>>, vector<2x8xf32>,
    } else {
    }
    return
  }
  func.func @transform_0(%arg0: i32) -> (i32, i32, i32) {
    %c0_i32 = arith.constant 0 : i32
    %c0_i32_0 = arith.constant 0 : i32
    %c0_i32_1 = arith.constant 0 : i32
    %c0_i32_2 = arith.constant 0 : i32
    return %c0_i32, %c0_i32_0, %c0_i32_1 : i32, i32, i32
  }
  func.func @transform_1(%arg0: i32) -> (i32, i32, i32) {
    %c0_i32 = arith.constant 0 : i32
    %c0_i32_0 = arith.constant 0 : i32
    %c0_i32_1 = arith.constant 0 : i32
    return %arg0, %c0_i32, %c0_i32_0 : i32, i32, i32
  }
  func.func @transform_2(%arg0: i32) -> (i32, i32, i32) {
    %c0_i32 = arith.constant 0 : i32
    %c0_i32_0 = arith.constant 0 : i32
    %c0_i32_1 = arith.constant 0 : i32
    return %arg0, %c0_i32, %c0_i32_0 : i32, i32, i32
  }
  func.func @transform_3(%arg0: i32) -> (i32, i32, i32) {
    %c0_i32 = arith.constant 0 : i32
    %c0_i32_0 = arith.constant 0 : i32
    %c0_i32_1 = arith.constant 0 : i32
    return %arg0, %c0_i32, %c0_i32_0 : i32, i32, i32
  }
  func.func @transform_4(%arg0: i32) -> (i32, i32, i32) {
    %c0_i32 = arith.constant 0 : i32
    %c0_i32_0 = arith.constant 0 : i32
    %c0_i32_1 = arith.constant 0 : i32
    return %arg0, %c0_i32, %c0_i32_0 : i32, i32, i32
  }
  func.func @transform_5(%arg0: i32) -> (i32, i32, i32) {
    %c0_i32 = arith.constant 0 : i32
    %c0_i32_0 = arith.constant 0 : i32
    %c0_i32_1 = arith.constant 0 : i32
    return %arg0, %c0_i32, %c0_i32_0 : i32, i32, i32
  }
  func.func @transform_6(%arg0: i32) -> (i32, i32) {
    %c0_i32 = arith.constant 0 : i32
    %c0_i32_0 = arith.constant 0 : i32
    %c0_i32_1 = arith.constant 0 : i32
    return %c0_i32, %c0_i32_0 : i32, i32
  }
  func.func @transform_7(%arg0: i32) -> (i32, i32) {
    %c0_i32 = arith.constant 0 : i32
    %c0_i32_0 = arith.constant 0 : i32
    %c0_i32_1 = arith.constant 0 : i32
    return %c0_i32, %c0_i32_0 : i32, i32
  }
  func.func @transform_8(%arg0: i32) -> (i32, i32) {
    %c0_i32 = arith.constant 0 : i32
    %c0_i32_0 = arith.constant 0 : i32
    %c0_i32_1 = arith.constant 0 : i32
    return %c0_i32, %c0_i32_0 : i32, i32
  }
}

</mosaic_0001>

<llo_original>
// kernel: tpu_custom_call.1
$region0: #{tpu_custom_call.1}
  #allocation0 [shape = 'u32[]', space=smem, size = 0x4, offset = 0x4, fixed_abs, tag = 'smem constant byte address 0x4 - core index']
  #allocation1 [shape = 'u32[144,128]{1,0:T(1,128)}', space=vmem, size = 0x12000, scoped, tag = 'internal scratch']
  #allocation2 [shape = 'f32[8,2,32]{2,1,0:T(2,128)}', space=vmem, size = 0x2000, scoped, tag = 'scratch operand']
  #allocation3 [shape = 'f32[8,2,128]{2,1,0:T(2,128)}', space=vmem, size = 0x2000, scoped, tag = 'scratch operand']
  %s0 = inlined_call_operand.vmem [shape: f32[8,2,1], index: 0, kind: input, shape index: {}]
  %s1 = inlined_call_operand.hbm [shape: f32[2,32,128], index: 1, kind: input, shape index: {}]
  %s2 = inlined_call_operand.vmem [shape: f32[2,32,128], index: 2, kind: input, shape index: {}]
  %s3 = inlined_call_operand.hbm [shape: f32[2,1,128], index: 3, kind: input, shape index: {}]
  %s4 = inlined_call_operand.hbm [shape: f32[2,2,32], index: 4, kind: input, shape index: {}]
  %s5 = inlined_call_operand.vmem [shape: f32[2,2,32], index: 5, kind: input, shape index: {}]
  %s6 = inlined_call_operand.vmem [shape: f32[32,8], index: 6, kind: input, shape index: {}]
  %s7 = inlined_call_operand.vmem [shape: f32[1,8], index: 7, kind: input, shape index: {}]
  %s8 = inlined_call_operand.hbm [shape: f32[2,8], index: 8, kind: output, shape index: {}]
  %s9 = sld [smem:[#allocation0]]
  $region89: #{tpu_custom_call.1} parent=0
    _
  %s11 = ssub.s32 1, %s9
  %s12 = scalar_select 0, %s11, %s9
  $region1: #{tpu_custom_call.1} parent=0
    #allocation4 [shape = 'u8[32768]{0}', space=vmem, size = 0x8000, scoped, tag = 'input window, operand 1']
    #allocation5 [shape = 's32[2]{0}', space=sflag, size = 0x8, scoped, tag = 'scoped memory for tpu_custom_call.1']
    #allocation6 [shape = 's32[2]{0}', space=sflag, size = 0x8, scoped, tag = 'scoped memory for tpu_custom_call.1']
    #allocation7 [shape = 'u8[1024]{0}', space=vmem, size = 0x400, scoped, tag = 'input window, operand 3']
    #allocation8 [shape = 's32[2]{0}', space=sflag, size = 0x8, scoped, tag = 'scoped memory for tpu_custom_call.1']
    #allocation9 [shape = 'u8[2048]{0}', space=vmem, size = 0x800, scoped, tag = 'input window, operand 4']
    #allocation10 [shape = 'u8[1024]{0}', space=vmem, size = 0x400, scoped, tag = 'output window, operand 0, single buffered']
    %13 = vsyncpa [#allocation5], 0
    %s14 = scalar_lea.sflag [#allocation5], 1
    %15 = vsyncpa %s14, 0
    %16 = vsyncpa [#allocation8], 0
    %s17 = scalar_lea.sflag [#allocation8], 1
    %18 = vsyncpa %s17, 0
    %19 = vsyncpa [#allocation6], 0
    loop: start=0, step=1, limit=4
    $region2: #{tpu_custom_call.1} parent=1 // loop_pre_header
      _
    $region3: #{tpu_custom_call.1} parent=1 // loop_header
      %s21 = sphi 0, %s25
      %p22 = scmp.ge.s32.totalorder %s21, 4
      %s29 = sphi 0, %s29
      %s31 = sphi 0, %s29
      %s32 = sphi 0, %s31
      %s46 = sphi 0, %s32
      %s52 = sphi 0, %s54
      %s55 = sphi 0, %s52
      %s56 = sphi 0, %s55
      %s72 = sphi 0, %s56
      %s78 = sphi 0, %s80
      %s81 = sphi 0, %s78
      %s82 = sphi 0, %s81
      %s98 = sphi 0, %s82
      %s104 = sphi 0, %s106
      %s107 = sphi 0, %s104
      %s108 = sphi 0, %s107
      %s124 = sphi 0, %s108
      %s130 = sphi 0, %s132
      %s133 = sphi 0, %s130
      %s134 = sphi 0, %s133
      %s150 = sphi 0, %s134
      %s156 = sphi 0, %s158
      %s159 = sphi 0, %s156
      %s160 = sphi 0, %s159
      %s176 = sphi 0, %s160
      %s180 = sphi 0, %s180
      %s182 = sphi 0, %s180
      %s183 = sphi 0, %s182
      %s197 = sphi 0, %s183
      %s201 = sphi 0, %s201
      %s203 = sphi 0, %s201
      %s204 = sphi 0, %s203
      %s218 = sphi 0, %s204
      %s222 = sphi 0, %s222
      %s224 = sphi 0, %s222
      %s225 = sphi 0, %s224
      %s239 = sphi 0, %s225
    $region4: #{tpu_custom_call.1} parent=1 // loop_header_branch
      %24 = sbr.rel (%p22) target = $region8
    $region5: #{tpu_custom_call.1} parent=1 // loop_body
      %s26 = ssub.s32 %s21, 1
      %s27 = ssub.s32 %s21, 2
      %s28 = sadd.s32 %s21, 1
      %s30 = sadd.s32 %s29, 1
      %p33 = scmp.eq.s32.totalorder %s21, 1
      %p34 = scmp.ne.s32.totalorder %s29, %s31
      %p35 = scmp.eq.s32.totalorder %s21, 0
      %p36 = por %p34, %p35
      %p37 = scmp.ne.s32.totalorder %s29, %s31
      %p38 = scmp.eq.s32.totalorder %s26, 1
      %p39 = por %p37, %p38
      %p40 = scmp.ne.s32.totalorder %s31, %s32
      %p41 = scmp.eq.s32.totalorder %s26, 0
      %p42 = por %p40, %p41
      %p43 = scmp.ne.s32.totalorder %s31, %s32
      %p44 = scmp.eq.s32.totalorder %s27, 1
      %p45 = por %p43, %p44
      %p47 = scmp.ne.s32.totalorder %s32, %s46
      %p48 = scmp.eq.s32.totalorder %s27, 0
      %p49 = por %p47, %p48
      %s50 = ssub.s32 %s21, %s28
      %p51 = scmp.eq.s32.totalorder %s50, 0
      %s53 = sadd.s32 %s52, 1
      %s54 = scalar_select %p51, %s52, %s53
      %p57 = pneg %p51
      %p58 = scmp.eq.s32.totalorder %s21, 1
      %p59 = por %p57, %p58
      %p60 = scmp.ne.s32.totalorder %s52, %s55
      %p61 = scmp.eq.s32.totalorder %s21, 0
      %p62 = por %p60, %p61
      %p63 = scmp.ne.s32.totalorder %s52, %s55
      %p64 = scmp.eq.s32.totalorder %s26, 1
      %p65 = por %p63, %p64
      %p66 = scmp.ne.s32.totalorder %s55, %s56
      %p67 = scmp.eq.s32.totalorder %s26, 0
      %p68 = por %p66, %p67
      %p69 = scmp.ne.s32.totalorder %s55, %s56
      %p70 = scmp.eq.s32.totalorder %s27, 1
      %p71 = por %p69, %p70
      %p73 = scmp.ne.s32.totalorder %s56, %s72
      %p74 = scmp.eq.s32.totalorder %s27, 0
      %p75 = por %p73, %p74
      %s76 = ssub.s32 %s21, %s28
      %p77 = scmp.eq.s32.totalorder %s76, 0
      %s79 = sadd.s32 %s78, 1
      %s80 = scalar_select %p77, %s78, %s79
      %p83 = pneg %p77
      %p84 = scmp.eq.s32.totalorder %s21, 1
      %p85 = por %p83, %p84
      %p86 = scmp.ne.s32.totalorder %s78, %s81
      %p87 = scmp.eq.s32.totalorder %s21, 0
      %p88 = por %p86, %p87
      %p89 = scmp.ne.s32.totalorder %s78, %s81
      %p90 = scmp.eq.s32.totalorder %s26, 1
      %p91 = por %p89, %p90
      %p92 = scmp.ne.s32.totalorder %s81, %s82
      %p93 = scmp.eq.s32.totalorder %s26, 0
      %p94 = por %p92, %p93
      %p95 = scmp.ne.s32.totalorder %s81, %s82
      %p96 = scmp.eq.s32.totalorder %s27, 1
      %p97 = por %p95, %p96
      %p99 = scmp.ne.s32.totalorder %s82, %s98
      %p100 = scmp.eq.s32.totalorder %s27, 0
      %p101 = por %p99, %p100
      %s102 = ssub.s32 %s21, %s28
      %p103 = scmp.eq.s32.totalorder %s102, 0
      %s105 = sadd.s32 %s104, 1
      %s106 = scalar_select %p103, %s104, %s105
      %p109 = pneg %p103
      %p110 = scmp.eq.s32.totalorder %s21, 1
      %p111 = por %p109, %p110
      %p112 = scmp.ne.s32.totalorder %s104, %s107
      %p113 = scmp.eq.s32.totalorder %s21, 0
      %p114 = por %p112, %p113
      %p115 = scmp.ne.s32.totalorder %s104, %s107
      %p116 = scmp.eq.s32.totalorder %s26, 1
      %p117 = por %p115, %p116
      %p118 = scmp.ne.s32.totalorder %s107, %s108
      %p119 = scmp.eq.s32.totalorder %s26, 0
      %p120 = por %p118, %p119
      %p121 = scmp.ne.s32.totalorder %s107, %s108
      %p122 = scmp.eq.s32.totalorder %s27, 1
      %p123 = por %p121, %p122
      %p125 = scmp.ne.s32.totalorder %s108, %s124
      %p126 = scmp.eq.s32.totalorder %s27, 0
      %p127 = por %p125, %p126
      %s128 = ssub.s32 %s21, %s28
      %p129 = scmp.eq.s32.totalorder %s128, 0
      %s131 = sadd.s32 %s130, 1
      %s132 = scalar_select %p129, %s130, %s131
      %p135 = pneg %p129
      %p136 = scmp.eq.s32.totalorder %s21, 1
      %p137 = por %p135, %p136
      %p138 = scmp.ne.s32.totalorder %s130, %s133
      %p139 = scmp.eq.s32.totalorder %s21, 0
      %p140 = por %p138, %p139
      %p141 = scmp.ne.s32.totalorder %s130, %s133
      %p142 = scmp.eq.s32.totalorder %s26, 1
      %p143 = por %p141, %p142
      %p144 = scmp.ne.s32.totalorder %s133, %s134
      %p145 = scmp.eq.s32.totalorder %s26, 0
      %p146 = por %p144, %p145
      %p147 = scmp.ne.s32.totalorder %s133, %s134
      %p148 = scmp.eq.s32.totalorder %s27, 1
      %p149 = por %p147, %p148
      %p151 = scmp.ne.s32.totalorder %s134, %s150
      %p152 = scmp.eq.s32.totalorder %s27, 0
      %p153 = por %p151, %p152
      %s154 = ssub.s32 %s21, %s28
      %p155 = scmp.eq.s32.totalorder %s154, 0
      %s157 = sadd.s32 %s156, 1
      %s158 = scalar_select %p155, %s156, %s157
      %p161 = pneg %p155
      %p162 = scmp.eq.s32.totalorder %s21, 1
      %p163 = por %p161, %p162
      %p164 = scmp.ne.s32.totalorder %s156, %s159
      %p165 = scmp.eq.s32.totalorder %s21, 0
      %p166 = por %p164, %p165
      %p167 = scmp.ne.s32.totalorder %s156, %s159
      %p168 = scmp.eq.s32.totalorder %s26, 1
      %p169 = por %p167, %p168
      %p170 = scmp.ne.s32.totalorder %s159, %s160
      %p171 = scmp.eq.s32.totalorder %s26, 0
      %p172 = por %p170, %p171
      %p173 = scmp.ne.s32.totalorder %s159, %s160
      %p174 = scmp.eq.s32.totalorder %s27, 1
      %p175 = por %p173, %p174
      %p177 = scmp.ne.s32.totalorder %s160, %s176
      %p178 = scmp.eq.s32.totalorder %s27, 0
      %p179 = por %p177, %p178
      %s181 = sadd.s32 %s180, 1
      %p184 = scmp.eq.s32.totalorder %s21, 1
      %p185 = scmp.ne.s32.totalorder %s180, %s182
      %p186 = scmp.eq.s32.totalorder %s21, 0
      %p187 = por %p185, %p186
      %p188 = scmp.ne.s32.totalorder %s180, %s182
      %p189 = scmp.eq.s32.totalorder %s26, 1
      %p190 = por %p188, %p189
      %p191 = scmp.ne.s32.totalorder %s182, %s183
      %p192 = scmp.eq.s32.totalorder %s26, 0
      %p193 = por %p191, %p192
      %p194 = scmp.ne.s32.totalorder %s182, %s183
      %p195 = scmp.eq.s32.totalorder %s27, 1
      %p196 = por %p194, %p195
      %p198 = scmp.ne.s32.totalorder %s183, %s197
      %p199 = scmp.eq.s32.totalorder %s27, 0
      %p200 = por %p198, %p199
      %s202 = sadd.s32 %s201, 1
      %p205 = scmp.eq.s32.totalorder %s21, 1
      %p206 = scmp.ne.s32.totalorder %s201, %s203
      %p207 = scmp.eq.s32.totalorder %s21, 0
      %p208 = por %p206, %p207
      %p209 = scmp.ne.s32.totalorder %s201, %s203
      %p210 = scmp.eq.s32.totalorder %s26, 1
      %p211 = por %p209, %p210
      %p212 = scmp.ne.s32.totalorder %s203, %s204
      %p213 = scmp.eq.s32.totalorder %s26, 0
      %p214 = por %p212, %p213
      %p215 = scmp.ne.s32.totalorder %s203, %s204
      %p216 = scmp.eq.s32.totalorder %s27, 1
      %p217 = por %p215, %p216
      %p219 = scmp.ne.s32.totalorder %s204, %s218
      %p220 = scmp.eq.s32.totalorder %s27, 0
      %p221 = por %p219, %p220
      %s223 = sadd.s32 %s222, 1
      %p226 = scmp.eq.s32.totalorder %s21, 1
      %p227 = scmp.ne.s32.totalorder %s222, %s224
      %p228 = scmp.eq.s32.totalorder %s21, 0
      %p229 = por %p227, %p228
      %p230 = scmp.ne.s32.totalorder %s222, %s224
      %p231 = scmp.eq.s32.totalorder %s26, 1
      %p232 = por %p230, %p231
      %p233 = scmp.ne.s32.totalorder %s224, %s225
      %p234 = scmp.eq.s32.totalorder %s26, 0
      %p235 = por %p233, %p234
      %p236 = scmp.ne.s32.totalorder %s224, %s225
      %p237 = scmp.eq.s32.totalorder %s27, 1
      %p238 = por %p236, %p237
      %p240 = scmp.ne.s32.totalorder %s225, %s239
      %p241 = scmp.eq.s32.totalorder %s27, 0
      %p242 = por %p240, %p241
      %p243 = scmp.le.s32.totalorder 1, %s21
      %p244 = scmp.lt.s32.totalorder %s21, 3
      %p245 = pnand %p243, %p244
      %p246 = pneg %p245
      // Predicated region
      $region9: #{tpu_custom_call.1} parent=5 // pred_check
        _
      $region10: #{tpu_custom_call.1} parent=5 // pred_check_branch
        %248 = sbr.rel (%p245) target = $region12
      $region11: #{tpu_custom_call.1} parent=5 // pred_region
        %s249 = ssub.s32 %s21, 1
        // Predicated region
        $region13: #{tpu_custom_call.1} parent=11 // pred_check
          %p250 = pneg %p42
        $region14: #{tpu_custom_call.1} parent=11 // pred_check_branch
          %252 = sbr.rel (%p250) target = $region16
        $region15: #{tpu_custom_call.1} parent=11 // pred_region
          _
        $region16: #{tpu_custom_call.1} parent=11 // pred_fallthru
          _
        // Predicated region
        $region17: #{tpu_custom_call.1} parent=11 // pred_check
          %p253 = pneg %p193
        $region18: #{tpu_custom_call.1} parent=11 // pred_check_branch
          %255 = sbr.rel (%p253) target = $region20
        $region19: #{tpu_custom_call.1} parent=11 // pred_region
          _
        $region20: #{tpu_custom_call.1} parent=11 // pred_fallthru
          _
        // Predicated region
        $region21: #{tpu_custom_call.1} parent=11 // pred_check
          %p256 = pneg %p214
        $region22: #{tpu_custom_call.1} parent=11 // pred_check_branch
          %258 = sbr.rel (%p256) target = $region24
        $region23: #{tpu_custom_call.1} parent=11 // pred_region
          _
        $region24: #{tpu_custom_call.1} parent=11 // pred_fallthru
          _
      $region12: #{tpu_custom_call.1} parent=5 // pred_fallthru
        _
      %p259 = scmp.lt.s32.totalorder %s21, 2
      // Predicated region
      $region25: #{tpu_custom_call.1} parent=5 // pred_check
        %p260 = pneg %p259
      $region26: #{tpu_custom_call.1} parent=5 // pred_check_branch
        %262 = sbr.rel (%p260) target = $region28
      $region27: #{tpu_custom_call.1} parent=5 // pred_region
        // Predicated region
        $region29: #{tpu_custom_call.1} parent=27 // pred_check
          %p263 = pneg %p62
        $region30: #{tpu_custom_call.1} parent=27 // pred_check_branch
          %265 = sbr.rel (%p263) target = $region32
        $region31: #{tpu_custom_call.1} parent=27 // pred_region
          %s266 = sand.u32 %s52, 1
          %s267 = scalar_lea.sflag [#allocation5], %s266
          %s268 = sand.u32 %s52, 1
          %s269 = smul.addr %s268, 32
          %s270 = scalar_lea.vmem [#allocation4], %s269
          %s272 = ssub.s32 512, 512
          %273 = vsyncadd %s267, %s272
          %s274 = smul.addr %s21, 4
          %s275 = smul.addr %s274, 128
          %s276 = scalar_lea.hbm %s1, %s275
          %s277 = sshll.u32 %s270, 4
          %s278 = int_to_ptr.vmem [resolvable:$true] %s277
          %283 = dma.hbm_to_vmem [thread:$0]  %s276, 512, %s278, %s267, 128, 128, 8
        $region32: #{tpu_custom_call.1} parent=27 // pred_fallthru
          _
        // Predicated region
        $region33: #{tpu_custom_call.1} parent=27 // pred_check
          %p284 = pneg %p88
        $region34: #{tpu_custom_call.1} parent=27 // pred_check_branch
          %286 = sbr.rel (%p284) target = $region36
        $region35: #{tpu_custom_call.1} parent=27 // pred_region
          %p287 = scmp.lt.s32.totalorder %s21, 1
          %s288 = scalar_select %p287, %s21, 1
          %s289 = smul.addr %s288, 4
          %s290 = smul.addr %s289, 8
          %s291 = scalar_lea.vmem %s2, %s290
        $region36: #{tpu_custom_call.1} parent=27 // pred_fallthru
          _
        // Predicated region
        $region37: #{tpu_custom_call.1} parent=27 // pred_check
          %p292 = pneg %p114
        $region38: #{tpu_custom_call.1} parent=27 // pred_check_branch
          %294 = sbr.rel (%p292) target = $region40
        $region39: #{tpu_custom_call.1} parent=27 // pred_region
          %s295 = sand.u32 %s21, 1
          %s296 = scalar_lea.sflag [#allocation8], %s295
          %s297 = sand.u32 %s104, 1
          %s298 = scalar_lea.vmem [#allocation7], %s297
          %s300 = ssub.s32 16, 16
          %301 = vsyncadd %s296, %s300
          %s302 = smul.addr %s21, 16
          %s303 = scalar_lea.hbm %s3, %s302
          %s305 = sshll.u32 %s298, 4
          %s306 = int_to_ptr.vmem [resolvable:$true] %s305
          %308 = dma.hbm_to_vmem [thread:$0]  %s303, 16, %s306, %s296
        $region40: #{tpu_custom_call.1} parent=27 // pred_fallthru
          _
        // Predicated region
        $region41: #{tpu_custom_call.1} parent=27 // pred_check
          %p309 = pneg %p140
        $region42: #{tpu_custom_call.1} parent=27 // pred_check_branch
          %311 = sbr.rel (%p309) target = $region44
        $region43: #{tpu_custom_call.1} parent=27 // pred_region
          %s312 = sand.u32 %s21, 1
          %s313 = scalar_lea.sflag [#allocation8], %s312
          %s314 = sand.u32 %s130, 1
          %s315 = smul.addr %s314, 2
          %s316 = scalar_lea.vmem [#allocation9], %s315
          %s318 = ssub.s32 32, 32
          %319 = vsyncadd %s313, %s318
          %s320 = smul.addr %s21, 32
          %s321 = scalar_lea.hbm %s4, %s320
          %s323 = sshll.u32 %s316, 4
          %s324 = int_to_ptr.vmem [resolvable:$true] %s323
          %326 = dma.hbm_to_vmem [thread:$0]  %s321, 32, %s324, %s313
        $region44: #{tpu_custom_call.1} parent=27 // pred_fallthru
          _
        // Predicated region
        $region45: #{tpu_custom_call.1} parent=27 // pred_check
          %p327 = pneg %p166
        $region46: #{tpu_custom_call.1} parent=27 // pred_check_branch
          %329 = sbr.rel (%p327) target = $region48
        $region47: #{tpu_custom_call.1} parent=27 // pred_region
          %p330 = scmp.lt.s32.totalorder %s21, 1
          %s331 = scalar_select %p330, %s21, 1
          %s332 = smul.addr %s331, 2
          %s333 = scalar_lea.vmem %s5, %s332
        $region48: #{tpu_custom_call.1} parent=27 // pred_fallthru
          _
      $region28: #{tpu_custom_call.1} parent=5 // pred_fallthru
        _
      %p334 = scmp.le.s32.totalorder 1, %s21
      %p335 = scmp.lt.s32.totalorder %s21, 3
      %p336 = pnand %p334, %p335
      %p337 = pneg %p336
      // Predicated region
      $region49: #{tpu_custom_call.1} parent=5 // pred_check
        _
      $region50: #{tpu_custom_call.1} parent=5 // pred_check_branch
        %339 = sbr.rel (%p336) target = $region52
      $region51: #{tpu_custom_call.1} parent=5 // pred_region
        %s340 = ssub.s32 %s21, 1
        %s341 = sand.u32 %s55, 1
        %s342 = scalar_lea.sflag [#allocation5], %s341
        %s343 = sand.u32 %s55, 1
        %s344 = smul.addr %s343, 32
        %s345 = scalar_lea.vmem [#allocation4], %s344
        // Predicated region
        $region53: #{tpu_custom_call.1} parent=51 // pred_check
          %p346 = pneg %p68
        $region54: #{tpu_custom_call.1} parent=51 // pred_check_branch
          %348 = sbr.rel (%p346) target = $region56
        $region55: #{tpu_custom_call.1} parent=51 // pred_region
          %349 = dma.done %s342, 512
        $region56: #{tpu_custom_call.1} parent=51 // pred_fallthru
          _
        %s350 = sand.u32 %s26, 1
        %s351 = scalar_lea.sflag [#allocation8], %s350
        %s352 = sand.u32 %s107, 1
        %s353 = scalar_lea.vmem [#allocation7], %s352
        // Predicated region
        $region57: #{tpu_custom_call.1} parent=51 // pred_check
          %p354 = pneg %p120
        $region58: #{tpu_custom_call.1} parent=51 // pred_check_branch
          %356 = sbr.rel (%p354) target = $region60
        $region59: #{tpu_custom_call.1} parent=51 // pred_region
          %357 = dma.done %s351, 16
        $region60: #{tpu_custom_call.1} parent=51 // pred_fallthru
          _
        %s358 = sand.u32 %s26, 1
        %s359 = scalar_lea.sflag [#allocation8], %s358
        %s360 = sand.u32 %s133, 1
        %s361 = smul.addr %s360, 2
        %s362 = scalar_lea.vmem [#allocation9], %s361
        // Predicated region
        $region61: #{tpu_custom_call.1} parent=51 // pred_check
          %p363 = pneg %p146
        $region62: #{tpu_custom_call.1} parent=51 // pred_check_branch
          %365 = sbr.rel (%p363) target = $region64
        $region63: #{tpu_custom_call.1} parent=51 // pred_region
          %366 = dma.done %s359, 32
        $region64: #{tpu_custom_call.1} parent=51 // pred_fallthru
          _
        %p367 = pneg %p42
        %p368 = pneg %p39
        %s369 = sand.u32 %s55, 1
        %s370 = scalar_lea.sflag [#allocation5], %s369
        %s371 = sand.u32 %s55, 1
        %s372 = smul.addr %s371, 32
        %s373 = scalar_lea.vmem [#allocation4], %s372
        %p374 = pneg %p68
        %p375 = pneg %p65
        %p376 = scmp.lt.s32.totalorder %s26, 1
        %s377 = scalar_select %p376, %s26, 1
        %s378 = smul.addr %s377, 4
        %s379 = smul.addr %s378, 8
        %s380 = scalar_lea.vmem %s2, %s379
        %p381 = pneg %p94
        %p382 = pneg %p91
        %s383 = sand.u32 %s26, 1
        %s384 = scalar_lea.sflag [#allocation8], %s383
        %s385 = sand.u32 %s107, 1
        %s386 = scalar_lea.vmem [#allocation7], %s385
        %p387 = pneg %p120
        %p388 = pneg %p117
        %s389 = sand.u32 %s26, 1
        %s390 = scalar_lea.sflag [#allocation8], %s389
        %s391 = sand.u32 %s133, 1
        %s392 = smul.addr %s391, 2
        %s393 = scalar_lea.vmem [#allocation9], %s392
        %p394 = pneg %p146
        %p395 = pneg %p143
        %p396 = scmp.lt.s32.totalorder %s26, 1
        %s397 = scalar_select %p396, %s26, 1
        %s398 = smul.addr %s397, 2
        %s399 = scalar_lea.vmem %s5, %s398
        %p400 = pneg %p172
        %p401 = pneg %p169
        %p402 = pneg %p193
        %p403 = pneg %p190
        %p404 = pneg %p214
        %p405 = pneg %p211
        %p406 = pneg %p235
        %p407 = pneg %p232
        %p408 = scmp.lt.s32.totalorder %s26, 1
        %s409 = scalar_select %p408, %s26, 1
        %s410 = smul.addr %s409, 4
        %s411 = smul.addr %s410, 8
        %s412 = scalar_lea.vmem %s2, %s411
        %p413 = scmp.lt.s32.totalorder %s26, 1
        %s414 = scalar_select %p413, %s26, 1
        %s415 = smul.addr %s414, 2
        %s416 = scalar_lea.vmem %s5, %s415
        %v417 = vld [vmem:[%s412] sm:$0xff]
        %v418 = vld [vmem:[%s412 + $0x8] sm:$0xff]
        %v419 = vld [vmem:[%s412 + $0x10] sm:$0xff]
        %v420 = vld [vmem:[%s412 + $0x18] sm:$0xff]
        %v421 = vld [vmem:[%s353] sm:$0x1]
        %p422 = scmp.eq.s32.totalorder %s26, 0
        // Predicated region
        $region65: #{tpu_custom_call.1} parent=51 // pred_check
          %p423 = pneg %p422
        $region66: #{tpu_custom_call.1} parent=51 // pred_check_branch
          %425 = sbr.rel (%p423) target = $region68
        $region67: #{tpu_custom_call.1} parent=51 // pred_region
          %v426 = vld [vmem:[%s345] sm:$0xff]
          %v427 = vld [vmem:[%s0] sm:$0x3]
          %v428 = vld [vmem:[%s0 + $0x2] sm:$0x3]
          %v429 = vld [vmem:[%s0 + $0x4] sm:$0x3]
          %v430 = vld [vmem:[%s0 + $0x6] sm:$0x3]
          %v431 = vld [vmem:[%s0 + $0x8] sm:$0x3]
          %v432 = vld [vmem:[%s0 + $0xa] sm:$0x3]
          %v433 = vld [vmem:[%s0 + $0xc] sm:$0x3]
          %v434 = vld [vmem:[%s0 + $0xe] sm:$0x3]
          %436 = vset.pattern.permute.xlu0 0
          %437 = vperm.xlu0 %436, %v427
          %v438 = vpop.permute.xlu0 %437
          %441 = vset.pattern.permute.xlu0 0
          %442 = vperm.xlu0 %441, %v428
          %v443 = vpop.permute.xlu0 %442
          %446 = vset.pattern.permute.xlu0 0
          %447 = vperm.xlu0 %446, %v429
          %v448 = vpop.permute.xlu0 %447
          %451 = vset.pattern.permute.xlu0 0
          %452 = vperm.xlu0 %451, %v430
          %v453 = vpop.permute.xlu0 %452
          %456 = vset.pattern.permute.xlu0 0
          %457 = vperm.xlu0 %456, %v431
          %v458 = vpop.permute.xlu0 %457
          %461 = vset.pattern.permute.xlu0 0
          %462 = vperm.xlu0 %461, %v432
          %v463 = vpop.permute.xlu0 %462
          %466 = vset.pattern.permute.xlu0 0
          %467 = vperm.xlu0 %466, %v433
          %v468 = vpop.permute.xlu0 %467
          %471 = vset.pattern.permute.xlu0 0
          %472 = vperm.xlu0 %471, %v434
          %v473 = vpop.permute.xlu0 %472
          %v475 = vlaneseq
          %v476 = vshrl.u32 %v475, 7
          %v477 = vsub.s32 0, %v476
          %v478 = vrot.slane %v426, %v477
          %v479 = vmul.f32 %v438, %v478
          %v480 = vmul.f32 %v443, %v478
          %v481 = vmul.f32 %v448, %v478
          %v482 = vmul.f32 %v453, %v478
          %v483 = vmul.f32 %v458, %v478
          %v484 = vmul.f32 %v463, %v478
          %v485 = vmul.f32 %v468, %v478
          %v486 = vmul.f32 %v473, %v478
          %v488 = vlaneseq
          %v489 = vshrl.u32 %v488, 7
          %v490 = vsub.s32 0, %v489
          %v491 = vrot.slane %v421, %v490
          %v493 = vadd.f32 %v479, %v491
          %v494 = vadd.f32 %v480, %v491
          %v495 = vadd.f32 %v481, %v491
          %v496 = vadd.f32 %v482, %v491
          %v497 = vadd.f32 %v483, %v491
          %v498 = vadd.f32 %v484, %v491
          %v499 = vadd.f32 %v485, %v491
          %v500 = vadd.f32 %v486, %v491
          %501 = vst [vmem:[#allocation3] sm:$0x3] %v493
          %502 = vst [vmem:[#allocation3 + $0x2] sm:$0x3] %v494
          %503 = vst [vmem:[#allocation3 + $0x4] sm:$0x3] %v495
          %504 = vst [vmem:[#allocation3 + $0x6] sm:$0x3] %v496
          %505 = vst [vmem:[#allocation3 + $0x8] sm:$0x3] %v497
          %506 = vst [vmem:[#allocation3 + $0xa] sm:$0x3] %v498
          %507 = vst [vmem:[#allocation3 + $0xc] sm:$0x3] %v499
          %508 = vst [vmem:[#allocation3 + $0xe] sm:$0x3] %v500
        $region68: #{tpu_custom_call.1} parent=51 // pred_fallthru
          _
        %p509 = scmp.gt.s32.totalorder %s26, 0
        // Predicated region
        $region69: #{tpu_custom_call.1} parent=51 // pred_check
          %p510 = pneg %p509
        $region70: #{tpu_custom_call.1} parent=51 // pred_check_branch
          %512 = sbr.rel (%p510) target = $region72
        $region71: #{tpu_custom_call.1} parent=51 // pred_region
          %v513 = vld [vmem:[#allocation2] sm:$0x3]
          %v514 = vld [vmem:[#allocation2 + $0x2] sm:$0x3]
          %v515 = vld [vmem:[#allocation2 + $0x4] sm:$0x3]
          %v516 = vld [vmem:[#allocation2 + $0x6] sm:$0x3]
          %v517 = vld [vmem:[#allocation2 + $0x8] sm:$0x3]
          %v518 = vld [vmem:[#allocation2 + $0xa] sm:$0x3]
          %v519 = vld [vmem:[#allocation2 + $0xc] sm:$0x3]
          %v520 = vld [vmem:[#allocation2 + $0xe] sm:$0x3]
          %v521 = vld [vmem:[%s345] sm:$0xff]
          %v522 = vld [vmem:[%s345 + $0x8] sm:$0xff]
          %v523 = vld [vmem:[%s345 + $0x10] sm:$0xff]
          %v524 = vld [vmem:[%s345 + $0x18] sm:$0xff]
          %v533 = vcombine.low %v513, %v514
          %v534 = vcombine.low %v515, %v516
          %v536 = vunpack.c.l.s4 1983009808
          %v537 = vunpack.c.0.s8 %v536
          %v538 = vlaneseq
          %v539 = vshrl.u32 %v538, 7
          %v540 = vsub.s32 %v537, %v539
          %v541 = vrot.slane %v533, %v540
          %v543 = vunpack.c.l.s4 1983009808
          %v544 = vunpack.c.0.s8 %v543
          %v545 = vlaneseq
          %v546 = vshrl.u32 %v545, 7
          %v547 = vsub.s32 %v544, %v546
          %v548 = vrot.slane %v534, %v547
          %v549 = vcombine.low %v541, %v548
          %v550 = vcombine.low %v517, %v518
          %v551 = vcombine.low %v519, %v520
          %v553 = vunpack.c.l.s4 1983009808
          %v554 = vunpack.c.0.s8 %v553
          %v555 = vlaneseq
          %v556 = vshrl.u32 %v555, 7
          %v557 = vsub.s32 %v554, %v556
          %v558 = vrot.slane %v550, %v557
          %v560 = vunpack.c.l.s4 1983009808
          %v561 = vunpack.c.0.s8 %v560
          %v562 = vlaneseq
          %v563 = vshrl.u32 %v562, 7
          %v564 = vsub.s32 %v561, %v563
          %v565 = vrot.slane %v551, %v564
          %v566 = vcombine.low %v558, %v565
          %vm567 = vcmask 261120
          %v568 = vsel %vm567, %v549, 0
          %v570 = vsel %vm567, %v566, 0
          %572 = vmatprep.subr.mxu0 0.0
          %573 = vmatpush1.msra.mxu0 %v521
          %574 = vmatprep.subr.mxu0 0.0
          %575 = vmatpush1.msra.mxu0 %v522
          %576 = vmatprep.subr.mxu0 0.0
          %577 = vmatpush1.msra.mxu0 %v523
          %578 = vmatprep.subr.mxu0 0.0
          %579 = vmatpush1.msra.mxu0 %v524
          %580 = vmatprep.subr.mxu0 0.0
          %581 = vmatpush1.msra.mxu0 0.0
          %582 = vmatprep.subr.mxu0 0.0
          %583 = vmatpush1.msra.mxu0 0.0
          %584 = vmatprep.subr.mxu0 0.0
          %585 = vmatpush1.msra.mxu0 0.0
          %586 = vmatprep.subr.mxu0 0.0
          %587 = vmatpush1.msra.mxu0 0.0
          %588 = vmatprep.subr.mxu0 0.0
          %589 = vmatpush1.msra.mxu0 0.0
          %590 = vmatprep.subr.mxu0 0.0
          %591 = vmatpush1.msra.mxu0 0.0
          %592 = vmatprep.subr.mxu0 0.0
          %593 = vmatpush1.msra.mxu0 0.0
          %594 = vmatprep.subr.mxu0 0.0
          %595 = vmatpush1.msra.mxu0 0.0
          %596 = vmatprep.subr.mxu0 0.0
          %597 = vmatpush1.msra.mxu0 0.0
          %598 = vmatprep.subr.mxu0 0.0
          %599 = vmatpush1.msra.mxu0 0.0
          %600 = vmatprep.subr.mxu0 0.0
          %601 = vmatpush1.msra.mxu0 0.0
          %602 = vmatprep.subr.mxu0 0.0
          %603 = vmatpush1.msra.mxu0 0.0
          %604 = vmatprep.subr.mxu0 0.0
          %605 = vmatpush1.msra.mxu0 0.0
          %606 = vmatprep.subr.mxu0 0.0
          %607 = vmatpush1.msra.mxu0 0.0
          %608 = vmatprep.subr.mxu0 0.0
          %609 = vmatpush1.msra.mxu0 0.0
          %610 = vmatprep.subr.mxu0 0.0
          %611 = vmatpush1.msra.mxu0 0.0
          %612 = vmatprep.subr.mxu0 0.0
          %613 = vmatpush1.msra.mxu0 0.0
          %614 = vmatprep.subr.mxu0 0.0
          %615 = vmatpush1.msra.mxu0 0.0
          %616 = vmatprep.subr.mxu0 0.0
          %617 = vmatpush1.msra.mxu0 0.0
          %618 = vmatprep.subr.mxu0 0.0
          %619 = vmatpush1.msra.mxu0 0.0
          %620 = vmatprep.subr.mxu0 0.0
          %621 = vmatpush1.msra.mxu0 0.0
          %622 = vmatprep.subr.mxu0 0.0
          %623 = vmatpush1.msra.mxu0 0.0
          %624 = vmatprep.subr.mxu0 0.0
          %625 = vmatpush1.msra.mxu0 0.0
          %626 = vmatprep.subr.mxu0 0.0
          %627 = vmatpush1.msra.mxu0 0.0
          %628 = vmatprep.subr.mxu0 0.0
          %629 = vmatpush1.msra.mxu0 0.0
          %630 = vmatprep.subr.mxu0 0.0
          %631 = vmatpush1.msra.mxu0 0.0
          %632 = vmatprep.subr.mxu0 0.0
          %633 = vmatpush1.msra.mxu0 0.0
          %634 = vmatprep.subr.mxu0 0.0
          %635 = vmatpush1.msra.mxu0 0.0
          %636 = vmatprep.mubr.f32.mxu0 0.0
          %637 = vmatmul.mubr.f32.gmra.mrb[0].mxu0 %v568
          %v638 = vpop.f32.mrb[0].mxu0
          %v639 = vadd.f32 0.0, %v638
          %v640 = vpop.f32.mrb[0].mxu0
          %641 = vmatprep.mubr.f32.mxu0 0.0
          %642 = vmatmul.mubr.f32.gmra.mrb[0].mxu0 %v570
          %v643 = vpop.f32.mrb[0].mxu0
          %v644 = vadd.f32 0.0, %v643
          %v645 = vpop.f32.mrb[0].mxu0
          %646 = vdwg.mxu0
          %v649 = vcombine.high %v639, %v639
          %v651 = vunpack.c.l.s4 1983009808
          %v652 = vunpack.c.0.s8 %v651
          %v653 = vlaneseq
          %v654 = vshrl.u32 %v653, 7
          %v655 = vsub.s32 %v652, %v654
          %v656 = vrot.slane %v639, %v655
          %v658 = vunpack.c.l.s4 1983009808
          %v659 = vunpack.c.0.s8 %v658
          %v660 = vlaneseq
          %v661 = vshrl.u32 %v660, 7
          %v662 = vsub.s32 %v659, %v661
          %v663 = vrot.slane %v649, %v662
          %v664 = vcombine.high %v656, %v656
          %v665 = vcombine.high %v663, %v663
          %v666 = vcombine.high %v644, %v644
          %v668 = vunpack.c.l.s4 1983009808
          %v669 = vunpack.c.0.s8 %v668
          %v670 = vlaneseq
          %v671 = vshrl.u32 %v670, 7
          %v672 = vsub.s32 %v669, %v671
          %v673 = vrot.slane %v644, %v672
          %v675 = vunpack.c.l.s4 1983009808
          %v676 = vunpack.c.0.s8 %v675
          %v677 = vlaneseq
          %v678 = vshrl.u32 %v677, 7
          %v679 = vsub.s32 %v676, %v678
          %v680 = vrot.slane %v666, %v679
          %v681 = vcombine.high %v673, %v673
          %v682 = vcombine.high %v680, %v680
          %v692 = vlaneseq
          %v693 = vshrl.u32 %v692, 7
          %v694 = vsub.s32 0, %v693
          %v695 = vrot.slane %v421, %v694
          %v697 = vadd.f32 %v656, %v695
          %v698 = vadd.f32 %v664, %v695
          %v699 = vadd.f32 %v663, %v695
          %v700 = vadd.f32 %v665, %v695
          %v701 = vadd.f32 %v673, %v695
          %v702 = vadd.f32 %v681, %v695
          %v703 = vadd.f32 %v680, %v695
          %v704 = vadd.f32 %v682, %v695
          %705 = vst [vmem:[#allocation3] sm:$0x3] %v697
          %706 = vst [vmem:[#allocation3 + $0x2] sm:$0x3] %v698
          %707 = vst [vmem:[#allocation3 + $0x4] sm:$0x3] %v699
          %708 = vst [vmem:[#allocation3 + $0x6] sm:$0x3] %v700
          %709 = vst [vmem:[#allocation3 + $0x8] sm:$0x3] %v701
          %710 = vst [vmem:[#allocation3 + $0xa] sm:$0x3] %v702
          %711 = vst [vmem:[#allocation3 + $0xc] sm:$0x3] %v703
          %712 = vst [vmem:[#allocation3 + $0xe] sm:$0x3] %v704
        $region72: #{tpu_custom_call.1} parent=51 // pred_fallthru
          _
        %v713 = vld [vmem:[%s362] sm:$0x3]
        %v714 = vld [vmem:[%s416] sm:$0x3]
        %v715 = vld [vmem:[#allocation3] sm:$0x3]
        %vm716 = vcmask 261120
        %v718 = vsel %vm716, %v713, 0
        %720 = vmatprep.subr.mxu0 0.0
        %721 = vmatpush1.msra.mxu0 %v417
        %722 = vmatprep.subr.mxu0 0.0
        %723 = vmatpush1.msra.mxu0 %v418
        %724 = vmatprep.subr.mxu0 0.0
        %725 = vmatpush1.msra.mxu0 %v419
        %726 = vmatprep.subr.mxu0 0.0
        %727 = vmatpush1.msra.mxu0 %v420
        %728 = vmatprep.subr.mxu0 0.0
        %729 = vmatpush1.msra.mxu0 0.0
        %730 = vmatprep.subr.mxu0 0.0
        %731 = vmatpush1.msra.mxu0 0.0
        %732 = vmatprep.subr.mxu0 0.0
        %733 = vmatpush1.msra.mxu0 0.0
        %734 = vmatprep.subr.mxu0 0.0
        %735 = vmatpush1.msra.mxu0 0.0
        %736 = vmatprep.subr.mxu0 0.0
        %737 = vmatpush1.msra.mxu0 0.0
        %738 = vmatprep.subr.mxu0 0.0
        %739 = vmatpush1.msra.mxu0 0.0
        %740 = vmatprep.subr.mxu0 0.0
        %741 = vmatpush1.msra.mxu0 0.0
        %742 = vmatprep.subr.mxu0 0.0
        %743 = vmatpush1.msra.mxu0 0.0
        %744 = vmatprep.subr.mxu0 0.0
        %745 = vmatpush1.msra.mxu0 0.0
        %746 = vmatprep.subr.mxu0 0.0
        %747 = vmatpush1.msra.mxu0 0.0
        %748 = vmatprep.subr.mxu0 0.0
        %749 = vmatpush1.msra.mxu0 0.0
        %750 = vmatprep.subr.mxu0 0.0
        %751 = vmatpush1.msra.mxu0 0.0
        %752 = vmatprep.subr.mxu0 0.0
        %753 = vmatpush1.msra.mxu0 0.0
        %754 = vmatprep.subr.mxu0 0.0
        %755 = vmatpush1.msra.mxu0 0.0
        %756 = vmatprep.subr.mxu0 0.0
        %757 = vmatpush1.msra.mxu0 0.0
        %758 = vmatprep.subr.mxu0 0.0
        %759 = vmatpush1.msra.mxu0 0.0
        %760 = vmatprep.subr.mxu0 0.0
        %761 = vmatpush1.msra.mxu0 0.0
        %762 = vmatprep.subr.mxu0 0.0
        %763 = vmatpush1.msra.mxu0 0.0
        %764 = vmatprep.subr.mxu0 0.0
        %765 = vmatpush1.msra.mxu0 0.0
        %766 = vmatprep.subr.mxu0 0.0
        %767 = vmatpush1.msra.mxu0 0.0
        %768 = vmatprep.subr.mxu0 0.0
        %769 = vmatpush1.msra.mxu0 0.0
        %770 = vmatprep.subr.mxu0 0.0
        %771 = vmatpush1.msra.mxu0 0.0
        %772 = vmatprep.subr.mxu0 0.0
        %773 = vmatpush1.msra.mxu0 0.0
        %774 = vmatprep.subr.mxu0 0.0
        %775 = vmatpush1.msra.mxu0 0.0
        %776 = vmatprep.subr.mxu0 0.0
        %777 = vmatpush1.msra.mxu0 0.0
        %778 = vmatprep.subr.mxu0 0.0
        %779 = vmatpush1.msra.mxu0 0.0
        %780 = vmatprep.subr.mxu0 0.0
        %781 = vmatpush1.msra.mxu0 0.0
        %782 = vmatprep.subr.mxu0 0.0
        %783 = vmatpush1.msra.mxu0 0.0
        %784 = vmatprep.mubr.f32.mxu0 0.0
        %785 = vmatmul.mubr.f32.gmra.mrb[0].mxu0 %v718
        %v786 = vpop.f32.mrb[0].mxu0
        %v787 = vadd.f32 %v715, %v786
        %v788 = vpop.f32.mrb[0].mxu0
        %789 = vdwg.mxu0
        %v790 = vxor.u32 %v787, 2147483648
        %v791 = vmul.f32 %v790, 1.442695
        %v792 = vpow.pop %v791
        %v793 = vadd.f32 %v792, 1.0
        %v794 = vrcp.pop %v793
        %v795 = vmul.f32 1.0, %v794
        %v796 = vtanh.pop %v787
        %798 = vrot.lane.b32.xlu0 %v714, 32
        %v799 = vpop.permute.xlu0 %798
        %v801 = vmul.f32 %v795, %v799
        %803 = vrot.lane.b32.xlu0 %v796, 64
        %v804 = vpop.permute.xlu0 %803
        %v806 = vmul.f32 %v795, %v804
        %808 = vrot.lane.b32.xlu0 %v806, 32
        %v809 = vpop.permute.xlu0 %808
        %v811 = vadd.f32 %v801, %v809
        %v812 = vtanh.pop %v811
        %814 = vrot.lane.b32.xlu0 %v812, 64
        %v815 = vpop.permute.xlu0 %814
        %v817 = vmul.f32 %v795, %v815
        %819 = vrot.lane.b32.xlu0 %v817, 32
        %v820 = vpop.permute.xlu0 %819
        %vm822 = vcmask 254976
        %823 = vst.msk [vmem:[#allocation2] sm:$0x3] %vm822, %v820
        %s824 = scalar_lea.vmem [#allocation3], 2
        %v825 = vld [vmem:[%s824] sm:$0x3]
        %v826 = vsel %vm716, %v820, 0
        %828 = vmatprep.subr.mxu0 0.0
        %829 = vmatpush1.msra.mxu0 %v417
        %830 = vmatprep.subr.mxu0 0.0
        %831 = vmatpush1.msra.mxu0 %v418
        %832 = vmatprep.subr.mxu0 0.0
        %833 = vmatpush1.msra.mxu0 %v419
        %834 = vmatprep.subr.mxu0 0.0
        %835 = vmatpush1.msra.mxu0 %v420
        %836 = vmatprep.subr.mxu0 0.0
        %837 = vmatpush1.msra.mxu0 0.0
        %838 = vmatprep.subr.mxu0 0.0
        %839 = vmatpush1.msra.mxu0 0.0
        %840 = vmatprep.subr.mxu0 0.0
        %841 = vmatpush1.msra.mxu0 0.0
        %842 = vmatprep.subr.mxu0 0.0
        %843 = vmatpush1.msra.mxu0 0.0
        %844 = vmatprep.subr.mxu0 0.0
        %845 = vmatpush1.msra.mxu0 0.0
        %846 = vmatprep.subr.mxu0 0.0
        %847 = vmatpush1.msra.mxu0 0.0
        %848 = vmatprep.subr.mxu0 0.0
        %849 = vmatpush1.msra.mxu0 0.0
        %850 = vmatprep.subr.mxu0 0.0
        %851 = vmatpush1.msra.mxu0 0.0
        %852 = vmatprep.subr.mxu0 0.0
        %853 = vmatpush1.msra.mxu0 0.0
        %854 = vmatprep.subr.mxu0 0.0
        %855 = vmatpush1.msra.mxu0 0.0
        %856 = vmatprep.subr.mxu0 0.0
        %857 = vmatpush1.msra.mxu0 0.0
        %858 = vmatprep.subr.mxu0 0.0
        %859 = vmatpush1.msra.mxu0 0.0
        %860 = vmatprep.subr.mxu0 0.0
        %861 = vmatpush1.msra.mxu0 0.0
        %862 = vmatprep.subr.mxu0 0.0
        %863 = vmatpush1.msra.mxu0 0.0
        %864 = vmatprep.subr.mxu0 0.0
        %865 = vmatpush1.msra.mxu0 0.0
        %866 = vmatprep.subr.mxu0 0.0
        %867 = vmatpush1.msra.mxu0 0.0
        %868 = vmatprep.subr.mxu0 0.0
        %869 = vmatpush1.msra.mxu0 0.0
        %870 = vmatprep.subr.mxu0 0.0
        %871 = vmatpush1.msra.mxu0 0.0
        %872 = vmatprep.subr.mxu0 0.0
        %873 = vmatpush1.msra.mxu0 0.0
        %874 = vmatprep.subr.mxu0 0.0
        %875 = vmatpush1.msra.mxu0 0.0
        %876 = vmatprep.subr.mxu0 0.0
        %877 = vmatpush1.msra.mxu0 0.0
        %878 = vmatprep.subr.mxu0 0.0
        %879 = vmatpush1.msra.mxu0 0.0
        %880 = vmatprep.subr.mxu0 0.0
        %881 = vmatpush1.msra.mxu0 0.0
        %882 = vmatprep.subr.mxu0 0.0
        %883 = vmatpush1.msra.mxu0 0.0
        %884 = vmatprep.subr.mxu0 0.0
        %885 = vmatpush1.msra.mxu0 0.0
        %886 = vmatprep.subr.mxu0 0.0
        %887 = vmatpush1.msra.mxu0 0.0
        %888 = vmatprep.subr.mxu0 0.0
        %889 = vmatpush1.msra.mxu0 0.0
        %890 = vmatprep.subr.mxu0 0.0
        %891 = vmatpush1.msra.mxu0 0.0
        %892 = vmatprep.mubr.f32.mxu0 0.0
        %893 = vmatmul.mubr.f32.gmra.mrb[0].mxu0 %v826
        %v894 = vpop.f32.mrb[0].mxu0
        %v895 = vadd.f32 %v825, %v894
        %v896 = vpop.f32.mrb[0].mxu0
        %897 = vdwg.mxu0
        %v898 = vxor.u32 %v895, 2147483648
        %v899 = vmul.f32 %v898, 1.442695
        %v900 = vpow.pop %v899
        %v901 = vadd.f32 %v900, 1.0
        %v902 = vrcp.pop %v901
        %v903 = vmul.f32 1.0, %v902
        %v904 = vtanh.pop %v895
        %v905 = vmul.f32 %v903, %v811
        %907 = vrot.lane.b32.xlu0 %v904, 64
        %v908 = vpop.permute.xlu0 %907
        %v910 = vmul.f32 %v903, %v908
        %912 = vrot.lane.b32.xlu0 %v910, 32
        %v913 = vpop.permute.xlu0 %912
        %v915 = vadd.f32 %v905, %v913
        %v916 = vtanh.pop %v915
        %918 = vrot.lane.b32.xlu0 %v916, 64
        %v919 = vpop.permute.xlu0 %918
        %v921 = vmul.f32 %v903, %v919
        %923 = vrot.lane.b32.xlu0 %v921, 32
        %v924 = vpop.permute.xlu0 %923
        %s926 = scalar_lea.vmem [#allocation2], 2
        %927 = vst.msk [vmem:[%s926] sm:$0x3] %vm822, %v924
        %s928 = scalar_lea.vmem [#allocation3], 4
        %v929 = vld [vmem:[%s928] sm:$0x3]
        %v930 = vsel %vm716, %v924, 0
        %932 = vmatprep.subr.mxu0 0.0
        %933 = vmatpush1.msra.mxu0 %v417
        %934 = vmatprep.subr.mxu0 0.0
        %935 = vmatpush1.msra.mxu0 %v418
        %936 = vmatprep.subr.mxu0 0.0
        %937 = vmatpush1.msra.mxu0 %v419
        %938 = vmatprep.subr.mxu0 0.0
        %939 = vmatpush1.msra.mxu0 %v420
        %940 = vmatprep.subr.mxu0 0.0
        %941 = vmatpush1.msra.mxu0 0.0
        %942 = vmatprep.subr.mxu0 0.0
        %943 = vmatpush1.msra.mxu0 0.0
        %944 = vmatprep.subr.mxu0 0.0
        %945 = vmatpush1.msra.mxu0 0.0
        %946 = vmatprep.subr.mxu0 0.0
        %947 = vmatpush1.msra.mxu0 0.0
        %948 = vmatprep.subr.mxu0 0.0
        %949 = vmatpush1.msra.mxu0 0.0
        %950 = vmatprep.subr.mxu0 0.0
        %951 = vmatpush1.msra.mxu0 0.0
        %952 = vmatprep.subr.mxu0 0.0
        %953 = vmatpush1.msra.mxu0 0.0
        %954 = vmatprep.subr.mxu0 0.0
        %955 = vmatpush1.msra.mxu0 0.0
        %956 = vmatprep.subr.mxu0 0.0
        %957 = vmatpush1.msra.mxu0 0.0
        %958 = vmatprep.subr.mxu0 0.0
        %959 = vmatpush1.msra.mxu0 0.0
        %960 = vmatprep.subr.mxu0 0.0
        %961 = vmatpush1.msra.mxu0 0.0
        %962 = vmatprep.subr.mxu0 0.0
        %963 = vmatpush1.msra.mxu0 0.0
        %964 = vmatprep.subr.mxu0 0.0
        %965 = vmatpush1.msra.mxu0 0.0
        %966 = vmatprep.subr.mxu0 0.0
        %967 = vmatpush1.msra.mxu0 0.0
        %968 = vmatprep.subr.mxu0 0.0
        %969 = vmatpush1.msra.mxu0 0.0
        %970 = vmatprep.subr.mxu0 0.0
        %971 = vmatpush1.msra.mxu0 0.0
        %972 = vmatprep.subr.mxu0 0.0
        %973 = vmatpush1.msra.mxu0 0.0
        %974 = vmatprep.subr.mxu0 0.0
        %975 = vmatpush1.msra.mxu0 0.0
        %976 = vmatprep.subr.mxu0 0.0
        %977 = vmatpush1.msra.mxu0 0.0
        %978 = vmatprep.subr.mxu0 0.0
        %979 = vmatpush1.msra.mxu0 0.0
        %980 = vmatprep.subr.mxu0 0.0
        %981 = vmatpush1.msra.mxu0 0.0
        %982 = vmatprep.subr.mxu0 0.0
        %983 = vmatpush1.msra.mxu0 0.0
        %984 = vmatprep.subr.mxu0 0.0
        %985 = vmatpush1.msra.mxu0 0.0
        %986 = vmatprep.subr.mxu0 0.0
        %987 = vmatpush1.msra.mxu0 0.0
        %988 = vmatprep.subr.mxu0 0.0
        %989 = vmatpush1.msra.mxu0 0.0
        %990 = vmatprep.subr.mxu0 0.0
        %991 = vmatpush1.msra.mxu0 0.0
        %992 = vmatprep.subr.mxu0 0.0
        %993 = vmatpush1.msra.mxu0 0.0
        %994 = vmatprep.subr.mxu0 0.0
        %995 = vmatpush1.msra.mxu0 0.0
        %996 = vmatprep.mubr.f32.mxu0 0.0
        %997 = vmatmul.mubr.f32.gmra.mrb[0].mxu0 %v930
        %v998 = vpop.f32.mrb[0].mxu0
        %v999 = vadd.f32 %v929, %v998
        %v1000 = vpop.f32.mrb[0].mxu0
        %1001 = vdwg.mxu0
        %v1002 = vxor.u32 %v999, 2147483648
        %v1003 = vmul.f32 %v1002, 1.442695
        %v1004 = vpow.pop %v1003
        %v1005 = vadd.f32 %v1004, 1.0
        %v1006 = vrcp.pop %v1005
        %v1007 = vmul.f32 1.0, %v1006
        %v1008 = vtanh.pop %v999
        %v1009 = vmul.f32 %v1007, %v915
        %1011 = vrot.lane.b32.xlu0 %v1008, 64
        %v1012 = vpop.permute.xlu0 %1011
        %v1014 = vmul.f32 %v1007, %v1012
        %1016 = vrot.lane.b32.xlu0 %v1014, 32
        %v1017 = vpop.permute.xlu0 %1016
        %v1019 = vadd.f32 %v1009, %v1017
        %v1020 = vtanh.pop %v1019
        %1022 = vrot.lane.b32.xlu0 %v1020, 64
        %v1023 = vpop.permute.xlu0 %1022
        %v1025 = vmul.f32 %v1007, %v1023
        %1027 = vrot.lane.b32.xlu0 %v1025, 32
        %v1028 = vpop.permute.xlu0 %1027
        %s1030 = scalar_lea.vmem [#allocation2], 4
        %1031 = vst.msk [vmem:[%s1030] sm:$0x3] %vm822, %v1028
        %s1032 = scalar_lea.vmem [#allocation3], 6
        %v1033 = vld [vmem:[%s1032] sm:$0x3]
        %v1034 = vsel %vm716, %v1028, 0
        %1036 = vmatprep.subr.mxu0 0.0
        %1037 = vmatpush1.msra.mxu0 %v417
        %1038 = vmatprep.subr.mxu0 0.0
        %1039 = vmatpush1.msra.mxu0 %v418
        %1040 = vmatprep.subr.mxu0 0.0
        %1041 = vmatpush1.msra.mxu0 %v419
        %1042 = vmatprep.subr.mxu0 0.0
        %1043 = vmatpush1.msra.mxu0 %v420
        %1044 = vmatprep.subr.mxu0 0.0
        %1045 = vmatpush1.msra.mxu0 0.0
        %1046 = vmatprep.subr.mxu0 0.0
        %1047 = vmatpush1.msra.mxu0 0.0
        %1048 = vmatprep.subr.mxu0 0.0
        %1049 = vmatpush1.msra.mxu0 0.0
        %1050 = vmatprep.subr.mxu0 0.0
        %1051 = vmatpush1.msra.mxu0 0.0
        %1052 = vmatprep.subr.mxu0 0.0
        %1053 = vmatpush1.msra.mxu0 0.0
        %1054 = vmatprep.subr.mxu0 0.0
        %1055 = vmatpush1.msra.mxu0 0.0
        %1056 = vmatprep.subr.mxu0 0.0
        %1057 = vmatpush1.msra.mxu0 0.0
        %1058 = vmatprep.subr.mxu0 0.0
        %1059 = vmatpush1.msra.mxu0 0.0
        %1060 = vmatprep.subr.mxu0 0.0
        %1061 = vmatpush1.msra.mxu0 0.0
        %1062 = vmatprep.subr.mxu0 0.0
        %1063 = vmatpush1.msra.mxu0 0.0
        %1064 = vmatprep.subr.mxu0 0.0
        %1065 = vmatpush1.msra.mxu0 0.0
        %1066 = vmatprep.subr.mxu0 0.0
        %1067 = vmatpush1.msra.mxu0 0.0
        %1068 = vmatprep.subr.mxu0 0.0
        %1069 = vmatpush1.msra.mxu0 0.0
        %1070 = vmatprep.subr.mxu0 0.0
        %1071 = vmatpush1.msra.mxu0 0.0
        %1072 = vmatprep.subr.mxu0 0.0
        %1073 = vmatpush1.msra.mxu0 0.0
        %1074 = vmatprep.subr.mxu0 0.0
        %1075 = vmatpush1.msra.mxu0 0.0
        %1076 = vmatprep.subr.mxu0 0.0
        %1077 = vmatpush1.msra.mxu0 0.0
        %1078 = vmatprep.subr.mxu0 0.0
        %1079 = vmatpush1.msra.mxu0 0.0
        %1080 = vmatprep.subr.mxu0 0.0
        %1081 = vmatpush1.msra.mxu0 0.0
        %1082 = vmatprep.subr.mxu0 0.0
        %1083 = vmatpush1.msra.mxu0 0.0
        %1084 = vmatprep.subr.mxu0 0.0
        %1085 = vmatpush1.msra.mxu0 0.0
        %1086 = vmatprep.subr.mxu0 0.0
        %1087 = vmatpush1.msra.mxu0 0.0
        %1088 = vmatprep.subr.mxu0 0.0
        %1089 = vmatpush1.msra.mxu0 0.0
        %1090 = vmatprep.subr.mxu0 0.0
        %1091 = vmatpush1.msra.mxu0 0.0
        %1092 = vmatprep.subr.mxu0 0.0
        %1093 = vmatpush1.msra.mxu0 0.0
        %1094 = vmatprep.subr.mxu0 0.0
        %1095 = vmatpush1.msra.mxu0 0.0
        %1096 = vmatprep.subr.mxu0 0.0
        %1097 = vmatpush1.msra.mxu0 0.0
        %1098 = vmatprep.subr.mxu0 0.0
        %1099 = vmatpush1.msra.mxu0 0.0
        %1100 = vmatprep.mubr.f32.mxu0 0.0
        %1101 = vmatmul.mubr.f32.gmra.mrb[0].mxu0 %v1034
        %v1102 = vpop.f32.mrb[0].mxu0
        %v1103 = vadd.f32 %v1033, %v1102
        %v1104 = vpop.f32.mrb[0].mxu0
        %1105 = vdwg.mxu0
        %v1106 = vxor.u32 %v1103, 2147483648
        %v1107 = vmul.f32 %v1106, 1.442695
        %v1108 = vpow.pop %v1107
        %v1109 = vadd.f32 %v1108, 1.0
        %v1110 = vrcp.pop %v1109
        %v1111 = vmul.f32 1.0, %v1110
        %v1112 = vtanh.pop %v1103
        %v1113 = vmul.f32 %v1111, %v1019
        %1115 = vrot.lane.b32.xlu0 %v1112, 64
        %v1116 = vpop.permute.xlu0 %1115
        %v1118 = vmul.f32 %v1111, %v1116
        %1120 = vrot.lane.b32.xlu0 %v1118, 32
        %v1121 = vpop.permute.xlu0 %1120
        %v1123 = vadd.f32 %v1113, %v1121
        %v1124 = vtanh.pop %v1123
        %1126 = vrot.lane.b32.xlu0 %v1124, 64
        %v1127 = vpop.permute.xlu0 %1126
        %v1129 = vmul.f32 %v1111, %v1127
        %1131 = vrot.lane.b32.xlu0 %v1129, 32
        %v1132 = vpop.permute.xlu0 %1131
        %s1134 = scalar_lea.vmem [#allocation2], 6
        %1135 = vst.msk [vmem:[%s1134] sm:$0x3] %vm822, %v1132
        %s1136 = scalar_lea.vmem [#allocation3], 8
        %v1137 = vld [vmem:[%s1136] sm:$0x3]
        %v1138 = vsel %vm716, %v1132, 0
        %1140 = vmatprep.subr.mxu0 0.0
        %1141 = vmatpush1.msra.mxu0 %v417
        %1142 = vmatprep.subr.mxu0 0.0
        %1143 = vmatpush1.msra.mxu0 %v418
        %1144 = vmatprep.subr.mxu0 0.0
        %1145 = vmatpush1.msra.mxu0 %v419
        %1146 = vmatprep.subr.mxu0 0.0
        %1147 = vmatpush1.msra.mxu0 %v420
        %1148 = vmatprep.subr.mxu0 0.0
        %1149 = vmatpush1.msra.mxu0 0.0
        %1150 = vmatprep.subr.mxu0 0.0
        %1151 = vmatpush1.msra.mxu0 0.0
        %1152 = vmatprep.subr.mxu0 0.0
        %1153 = vmatpush1.msra.mxu0 0.0
        %1154 = vmatprep.subr.mxu0 0.0
        %1155 = vmatpush1.msra.mxu0 0.0
        %1156 = vmatprep.subr.mxu0 0.0
        %1157 = vmatpush1.msra.mxu0 0.0
        %1158 = vmatprep.subr.mxu0 0.0
        %1159 = vmatpush1.msra.mxu0 0.0
        %1160 = vmatprep.subr.mxu0 0.0
        %1161 = vmatpush1.msra.mxu0 0.0
        %1162 = vmatprep.subr.mxu0 0.0
        %1163 = vmatpush1.msra.mxu0 0.0
        %1164 = vmatprep.subr.mxu0 0.0
        %1165 = vmatpush1.msra.mxu0 0.0
        %1166 = vmatprep.subr.mxu0 0.0
        %1167 = vmatpush1.msra.mxu0 0.0
        %1168 = vmatprep.subr.mxu0 0.0
        %1169 = vmatpush1.msra.mxu0 0.0
        %1170 = vmatprep.subr.mxu0 0.0
        %1171 = vmatpush1.msra.mxu0 0.0
        %1172 = vmatprep.subr.mxu0 0.0
        %1173 = vmatpush1.msra.mxu0 0.0
        %1174 = vmatprep.subr.mxu0 0.0
        %1175 = vmatpush1.msra.mxu0 0.0
        %1176 = vmatprep.subr.mxu0 0.0
        %1177 = vmatpush1.msra.mxu0 0.0
        %1178 = vmatprep.subr.mxu0 0.0
        %1179 = vmatpush1.msra.mxu0 0.0
        %1180 = vmatprep.subr.mxu0 0.0
        %1181 = vmatpush1.msra.mxu0 0.0
        %1182 = vmatprep.subr.mxu0 0.0
        %1183 = vmatpush1.msra.mxu0 0.0
        %1184 = vmatprep.subr.mxu0 0.0
        %1185 = vmatpush1.msra.mxu0 0.0
        %1186 = vmatprep.subr.mxu0 0.0
        %1187 = vmatpush1.msra.mxu0 0.0
        %1188 = vmatprep.subr.mxu0 0.0
        %1189 = vmatpush1.msra.mxu0 0.0
        %1190 = vmatprep.subr.mxu0 0.0
        %1191 = vmatpush1.msra.mxu0 0.0
        %1192 = vmatprep.subr.mxu0 0.0
        %1193 = vmatpush1.msra.mxu0 0.0
        %1194 = vmatprep.subr.mxu0 0.0
        %1195 = vmatpush1.msra.mxu0 0.0
        %1196 = vmatprep.subr.mxu0 0.0
        %1197 = vmatpush1.msra.mxu0 0.0
        %1198 = vmatprep.subr.mxu0 0.0
        %1199 = vmatpush1.msra.mxu0 0.0
        %1200 = vmatprep.subr.mxu0 0.0
        %1201 = vmatpush1.msra.mxu0 0.0
        %1202 = vmatprep.subr.mxu0 0.0
        %1203 = vmatpush1.msra.mxu0 0.0
        %1204 = vmatprep.mubr.f32.mxu0 0.0
        %1205 = vmatmul.mubr.f32.gmra.mrb[0].mxu0 %v1138
        %v1206 = vpop.f32.mrb[0].mxu0
        %v1207 = vadd.f32 %v1137, %v1206
        %v1208 = vpop.f32.mrb[0].mxu0
        %1209 = vdwg.mxu0
        %v1210 = vxor.u32 %v1207, 2147483648
        %v1211 = vmul.f32 %v1210, 1.442695
        %v1212 = vpow.pop %v1211
        %v1213 = vadd.f32 %v1212, 1.0
        %v1214 = vrcp.pop %v1213
        %v1215 = vmul.f32 1.0, %v1214
        %v1216 = vtanh.pop %v1207
        %v1217 = vmul.f32 %v1215, %v1123
        %1219 = vrot.lane.b32.xlu0 %v1216, 64
        %v1220 = vpop.permute.xlu0 %1219
        %v1222 = vmul.f32 %v1215, %v1220
        %1224 = vrot.lane.b32.xlu0 %v1222, 32
        %v1225 = vpop.permute.xlu0 %1224
        %v1227 = vadd.f32 %v1217, %v1225
        %v1228 = vtanh.pop %v1227
        %1230 = vrot.lane.b32.xlu0 %v1228, 64
        %v1231 = vpop.permute.xlu0 %1230
        %v1233 = vmul.f32 %v1215, %v1231
        %1235 = vrot.lane.b32.xlu0 %v1233, 32
        %v1236 = vpop.permute.xlu0 %1235
        %s1238 = scalar_lea.vmem [#allocation2], 8
        %1239 = vst.msk [vmem:[%s1238] sm:$0x3] %vm822, %v1236
        %s1240 = scalar_lea.vmem [#allocation3], 10
        %v1241 = vld [vmem:[%s1240] sm:$0x3]
        %v1242 = vsel %vm716, %v1236, 0
        %1244 = vmatprep.subr.mxu0 0.0
        %1245 = vmatpush1.msra.mxu0 %v417
        %1246 = vmatprep.subr.mxu0 0.0
        %1247 = vmatpush1.msra.mxu0 %v418
        %1248 = vmatprep.subr.mxu0 0.0
        %1249 = vmatpush1.msra.mxu0 %v419
        %1250 = vmatprep.subr.mxu0 0.0
        %1251 = vmatpush1.msra.mxu0 %v420
        %1252 = vmatprep.subr.mxu0 0.0
        %1253 = vmatpush1.msra.mxu0 0.0
        %1254 = vmatprep.subr.mxu0 0.0
        %1255 = vmatpush1.msra.mxu0 0.0
        %1256 = vmatprep.subr.mxu0 0.0
        %1257 = vmatpush1.msra.mxu0 0.0
        %1258 = vmatprep.subr.mxu0 0.0
        %1259 = vmatpush1.msra.mxu0 0.0
        %1260 = vmatprep.subr.mxu0 0.0
        %1261 = vmatpush1.msra.mxu0 0.0
        %1262 = vmatprep.subr.mxu0 0.0
        %1263 = vmatpush1.msra.mxu0 0.0
        %1264 = vmatprep.subr.mxu0 0.0
        %1265 = vmatpush1.msra.mxu0 0.0
        %1266 = vmatprep.subr.mxu0 0.0
        %1267 = vmatpush1.msra.mxu0 0.0
        %1268 = vmatprep.subr.mxu0 0.0
        %1269 = vmatpush1.msra.mxu0 0.0
        %1270 = vmatprep.subr.mxu0 0.0
        %1271 = vmatpush1.msra.mxu0 0.0
        %1272 = vmatprep.subr.mxu0 0.0
        %1273 = vmatpush1.msra.mxu0 0.0
        %1274 = vmatprep.subr.mxu0 0.0
        %1275 = vmatpush1.msra.mxu0 0.0
        %1276 = vmatprep.subr.mxu0 0.0
        %1277 = vmatpush1.msra.mxu0 0.0
        %1278 = vmatprep.subr.mxu0 0.0
        %1279 = vmatpush1.msra.mxu0 0.0
        %1280 = vmatprep.subr.mxu0 0.0
        %1281 = vmatpush1.msra.mxu0 0.0
        %1282 = vmatprep.subr.mxu0 0.0
        %1283 = vmatpush1.msra.mxu0 0.0
        %1284 = vmatprep.subr.mxu0 0.0
        %1285 = vmatpush1.msra.mxu0 0.0
        %1286 = vmatprep.subr.mxu0 0.0
        %1287 = vmatpush1.msra.mxu0 0.0
        %1288 = vmatprep.subr.mxu0 0.0
        %1289 = vmatpush1.msra.mxu0 0.0
        %1290 = vmatprep.subr.mxu0 0.0
        %1291 = vmatpush1.msra.mxu0 0.0
        %1292 = vmatprep.subr.mxu0 0.0
        %1293 = vmatpush1.msra.mxu0 0.0
        %1294 = vmatprep.subr.mxu0 0.0
        %1295 = vmatpush1.msra.mxu0 0.0
        %1296 = vmatprep.subr.mxu0 0.0
        %1297 = vmatpush1.msra.mxu0 0.0
        %1298 = vmatprep.subr.mxu0 0.0
        %1299 = vmatpush1.msra.mxu0 0.0
        %1300 = vmatprep.subr.mxu0 0.0
        %1301 = vmatpush1.msra.mxu0 0.0
        %1302 = vmatprep.subr.mxu0 0.0
        %1303 = vmatpush1.msra.mxu0 0.0
        %1304 = vmatprep.subr.mxu0 0.0
        %1305 = vmatpush1.msra.mxu0 0.0
        %1306 = vmatprep.subr.mxu0 0.0
        %1307 = vmatpush1.msra.mxu0 0.0
        %1308 = vmatprep.mubr.f32.mxu0 0.0
        %1309 = vmatmul.mubr.f32.gmra.mrb[0].mxu0 %v1242
        %v1310 = vpop.f32.mrb[0].mxu0
        %v1311 = vadd.f32 %v1241, %v1310
        %v1312 = vpop.f32.mrb[0].mxu0
        %1313 = vdwg.mxu0
        %v1314 = vxor.u32 %v1311, 2147483648
        %v1315 = vmul.f32 %v1314, 1.442695
        %v1316 = vpow.pop %v1315
        %v1317 = vadd.f32 %v1316, 1.0
        %v1318 = vrcp.pop %v1317
        %v1319 = vmul.f32 1.0, %v1318
        %v1320 = vtanh.pop %v1311
        %v1321 = vmul.f32 %v1319, %v1227
        %1323 = vrot.lane.b32.xlu0 %v1320, 64
        %v1324 = vpop.permute.xlu0 %1323
        %v1326 = vmul.f32 %v1319, %v1324
        %1328 = vrot.lane.b32.xlu0 %v1326, 32
        %v1329 = vpop.permute.xlu0 %1328
        %v1331 = vadd.f32 %v1321, %v1329
        %v1332 = vtanh.pop %v1331
        %1334 = vrot.lane.b32.xlu0 %v1332, 64
        %v1335 = vpop.permute.xlu0 %1334
        %v1337 = vmul.f32 %v1319, %v1335
        %1339 = vrot.lane.b32.xlu0 %v1337, 32
        %v1340 = vpop.permute.xlu0 %1339
        %s1342 = scalar_lea.vmem [#allocation2], 10
        %1343 = vst.msk [vmem:[%s1342] sm:$0x3] %vm822, %v1340
        %s1344 = scalar_lea.vmem [#allocation3], 12
        %v1345 = vld [vmem:[%s1344] sm:$0x3]
        %v1346 = vsel %vm716, %v1340, 0
        %1348 = vmatprep.subr.mxu0 0.0
        %1349 = vmatpush1.msra.mxu0 %v417
        %1350 = vmatprep.subr.mxu0 0.0
        %1351 = vmatpush1.msra.mxu0 %v418
        %1352 = vmatprep.subr.mxu0 0.0
        %1353 = vmatpush1.msra.mxu0 %v419
        %1354 = vmatprep.subr.mxu0 0.0
        %1355 = vmatpush1.msra.mxu0 %v420
        %1356 = vmatprep.subr.mxu0 0.0
        %1357 = vmatpush1.msra.mxu0 0.0
        %1358 = vmatprep.subr.mxu0 0.0
        %1359 = vmatpush1.msra.mxu0 0.0
        %1360 = vmatprep.subr.mxu0 0.0
        %1361 = vmatpush1.msra.mxu0 0.0
        %1362 = vmatprep.subr.mxu0 0.0
        %1363 = vmatpush1.msra.mxu0 0.0
        %1364 = vmatprep.subr.mxu0 0.0
        %1365 = vmatpush1.msra.mxu0 0.0
        %1366 = vmatprep.subr.mxu0 0.0
        %1367 = vmatpush1.msra.mxu0 0.0
        %1368 = vmatprep.subr.mxu0 0.0
        %1369 = vmatpush1.msra.mxu0 0.0
        %1370 = vmatprep.subr.mxu0 0.0
        %1371 = vmatpush1.msra.mxu0 0.0
        %1372 = vmatprep.subr.mxu0 0.0
        %1373 = vmatpush1.msra.mxu0 0.0
        %1374 = vmatprep.subr.mxu0 0.0
        %1375 = vmatpush1.msra.mxu0 0.0
        %1376 = vmatprep.subr.mxu0 0.0
        %1377 = vmatpush1.msra.mxu0 0.0
        %1378 = vmatprep.subr.mxu0 0.0
        %1379 = vmatpush1.msra.mxu0 0.0
        %1380 = vmatprep.subr.mxu0 0.0
        %1381 = vmatpush1.msra.mxu0 0.0
        %1382 = vmatprep.subr.mxu0 0.0
        %1383 = vmatpush1.msra.mxu0 0.0
        %1384 = vmatprep.subr.mxu0 0.0
        %1385 = vmatpush1.msra.mxu0 0.0
        %1386 = vmatprep.subr.mxu0 0.0
        %1387 = vmatpush1.msra.mxu0 0.0
        %1388 = vmatprep.subr.mxu0 0.0
        %1389 = vmatpush1.msra.mxu0 0.0
        %1390 = vmatprep.subr.mxu0 0.0
        %1391 = vmatpush1.msra.mxu0 0.0
        %1392 = vmatprep.subr.mxu0 0.0
        %1393 = vmatpush1.msra.mxu0 0.0
        %1394 = vmatprep.subr.mxu0 0.0
        %1395 = vmatpush1.msra.mxu0 0.0
        %1396 = vmatprep.subr.mxu0 0.0
        %1397 = vmatpush1.msra.mxu0 0.0
        %1398 = vmatprep.subr.mxu0 0.0
        %1399 = vmatpush1.msra.mxu0 0.0
        %1400 = vmatprep.subr.mxu0 0.0
        %1401 = vmatpush1.msra.mxu0 0.0
        %1402 = vmatprep.subr.mxu0 0.0
        %1403 = vmatpush1.msra.mxu0 0.0
        %1404 = vmatprep.subr.mxu0 0.0
        %1405 = vmatpush1.msra.mxu0 0.0
        %1406 = vmatprep.subr.mxu0 0.0
        %1407 = vmatpush1.msra.mxu0 0.0
        %1408 = vmatprep.subr.mxu0 0.0
        %1409 = vmatpush1.msra.mxu0 0.0
        %1410 = vmatprep.subr.mxu0 0.0
        %1411 = vmatpush1.msra.mxu0 0.0
        %1412 = vmatprep.mubr.f32.mxu0 0.0
        %1413 = vmatmul.mubr.f32.gmra.mrb[0].mxu0 %v1346
        %v1414 = vpop.f32.mrb[0].mxu0
        %v1415 = vadd.f32 %v1345, %v1414
        %v1416 = vpop.f32.mrb[0].mxu0
        %1417 = vdwg.mxu0
        %v1418 = vxor.u32 %v1415, 2147483648
        %v1419 = vmul.f32 %v1418, 1.442695
        %v1420 = vpow.pop %v1419
        %v1421 = vadd.f32 %v1420, 1.0
        %v1422 = vrcp.pop %v1421
        %v1423 = vmul.f32 1.0, %v1422
        %v1424 = vtanh.pop %v1415
        %v1425 = vmul.f32 %v1423, %v1331
        %1427 = vrot.lane.b32.xlu0 %v1424, 64
        %v1428 = vpop.permute.xlu0 %1427
        %v1430 = vmul.f32 %v1423, %v1428
        %1432 = vrot.lane.b32.xlu0 %v1430, 32
        %v1433 = vpop.permute.xlu0 %1432
        %v1435 = vadd.f32 %v1425, %v1433
        %v1436 = vtanh.pop %v1435
        %1438 = vrot.lane.b32.xlu0 %v1436, 64
        %v1439 = vpop.permute.xlu0 %1438
        %v1441 = vmul.f32 %v1423, %v1439
        %1443 = vrot.lane.b32.xlu0 %v1441, 32
        %v1444 = vpop.permute.xlu0 %1443
        %s1446 = scalar_lea.vmem [#allocation2], 12
        %1447 = vst.msk [vmem:[%s1446] sm:$0x3] %vm822, %v1444
        %s1448 = scalar_lea.vmem [#allocation3], 14
        %v1449 = vld [vmem:[%s1448] sm:$0x3]
        %v1450 = vsel %vm716, %v1444, 0
        %1452 = vmatprep.subr.mxu0 0.0
        %1453 = vmatpush1.msra.mxu0 %v417
        %1454 = vmatprep.subr.mxu0 0.0
        %1455 = vmatpush1.msra.mxu0 %v418
        %1456 = vmatprep.subr.mxu0 0.0
        %1457 = vmatpush1.msra.mxu0 %v419
        %1458 = vmatprep.subr.mxu0 0.0
        %1459 = vmatpush1.msra.mxu0 %v420
        %1460 = vmatprep.subr.mxu0 0.0
        %1461 = vmatpush1.msra.mxu0 0.0
        %1462 = vmatprep.subr.mxu0 0.0
        %1463 = vmatpush1.msra.mxu0 0.0
        %1464 = vmatprep.subr.mxu0 0.0
        %1465 = vmatpush1.msra.mxu0 0.0
        %1466 = vmatprep.subr.mxu0 0.0
        %1467 = vmatpush1.msra.mxu0 0.0
        %1468 = vmatprep.subr.mxu0 0.0
        %1469 = vmatpush1.msra.mxu0 0.0
        %1470 = vmatprep.subr.mxu0 0.0
        %1471 = vmatpush1.msra.mxu0 0.0
        %1472 = vmatprep.subr.mxu0 0.0
        %1473 = vmatpush1.msra.mxu0 0.0
        %1474 = vmatprep.subr.mxu0 0.0
        %1475 = vmatpush1.msra.mxu0 0.0
        %1476 = vmatprep.subr.mxu0 0.0
        %1477 = vmatpush1.msra.mxu0 0.0
        %1478 = vmatprep.subr.mxu0 0.0
        %1479 = vmatpush1.msra.mxu0 0.0
        %1480 = vmatprep.subr.mxu0 0.0
        %1481 = vmatpush1.msra.mxu0 0.0
        %1482 = vmatprep.subr.mxu0 0.0
        %1483 = vmatpush1.msra.mxu0 0.0
        %1484 = vmatprep.subr.mxu0 0.0
        %1485 = vmatpush1.msra.mxu0 0.0
        %1486 = vmatprep.subr.mxu0 0.0
        %1487 = vmatpush1.msra.mxu0 0.0
        %1488 = vmatprep.subr.mxu0 0.0
        %1489 = vmatpush1.msra.mxu0 0.0
        %1490 = vmatprep.subr.mxu0 0.0
        %1491 = vmatpush1.msra.mxu0 0.0
        %1492 = vmatprep.subr.mxu0 0.0
        %1493 = vmatpush1.msra.mxu0 0.0
        %1494 = vmatprep.subr.mxu0 0.0
        %1495 = vmatpush1.msra.mxu0 0.0
        %1496 = vmatprep.subr.mxu0 0.0
        %1497 = vmatpush1.msra.mxu0 0.0
        %1498 = vmatprep.subr.mxu0 0.0
        %1499 = vmatpush1.msra.mxu0 0.0
        %1500 = vmatprep.subr.mxu0 0.0
        %1501 = vmatpush1.msra.mxu0 0.0
        %1502 = vmatprep.subr.mxu0 0.0
        %1503 = vmatpush1.msra.mxu0 0.0
        %1504 = vmatprep.subr.mxu0 0.0
        %1505 = vmatpush1.msra.mxu0 0.0
        %1506 = vmatprep.subr.mxu0 0.0
        %1507 = vmatpush1.msra.mxu0 0.0
        %1508 = vmatprep.subr.mxu0 0.0
        %1509 = vmatpush1.msra.mxu0 0.0
        %1510 = vmatprep.subr.mxu0 0.0
        %1511 = vmatpush1.msra.mxu0 0.0
        %1512 = vmatprep.subr.mxu0 0.0
        %1513 = vmatpush1.msra.mxu0 0.0
        %1514 = vmatprep.subr.mxu0 0.0
        %1515 = vmatpush1.msra.mxu0 0.0
        %1516 = vmatprep.mubr.f32.mxu0 0.0
        %1517 = vmatmul.mubr.f32.gmra.mrb[0].mxu0 %v1450
        %v1518 = vpop.f32.mrb[0].mxu0
        %v1519 = vadd.f32 %v1449, %v1518
        %v1520 = vpop.f32.mrb[0].mxu0
        %1521 = vdwg.mxu0
        %v1522 = vxor.u32 %v1519, 2147483648
        %v1523 = vmul.f32 %v1522, 1.442695
        %v1524 = vpow.pop %v1523
        %v1525 = vadd.f32 %v1524, 1.0
        %v1526 = vrcp.pop %v1525
        %v1527 = vmul.f32 1.0, %v1526
        %v1528 = vtanh.pop %v1519
        %v1529 = vmul.f32 %v1527, %v1435
        %1531 = vrot.lane.b32.xlu0 %v1528, 64
        %v1532 = vpop.permute.xlu0 %1531
        %v1534 = vmul.f32 %v1527, %v1532
        %1536 = vrot.lane.b32.xlu0 %v1534, 32
        %v1537 = vpop.permute.xlu0 %1536
        %v1539 = vadd.f32 %v1529, %v1537
        %v1540 = vtanh.pop %v1539
        %1542 = vrot.lane.b32.xlu0 %v1540, 64
        %v1543 = vpop.permute.xlu0 %1542
        %v1545 = vmul.f32 %v1527, %v1543
        %1547 = vrot.lane.b32.xlu0 %v1545, 32
        %v1548 = vpop.permute.xlu0 %1547
        %s1550 = scalar_lea.vmem [#allocation2], 14
        %1551 = vst.msk [vmem:[%s1550] sm:$0x3] %vm822, %v1548
        %p1552 = scmp.eq.s32.totalorder %s26, 1
        // Predicated region
        $region73: #{tpu_custom_call.1} parent=51 // pred_check
          %p1553 = pneg %p1552
        $region74: #{tpu_custom_call.1} parent=51 // pred_check_branch
          %1555 = sbr.rel (%p1553) target = $region76
        $region75: #{tpu_custom_call.1} parent=51 // pred_region
          %v1556 = vld [vmem:[%s6] sm:$0xff]
          %v1557 = vld [vmem:[%s6 + $0x8] sm:$0xff]
          %v1558 = vld [vmem:[%s6 + $0x10] sm:$0xff]
          %v1559 = vld [vmem:[%s6 + $0x18] sm:$0xff]
          %v1560 = vld [vmem:[%s7] sm:$0x1]
          %v1562 = vlaneseq
          %v1563 = vshrl.u32 %v1562, 7
          %v1564 = vsub.s32 0, %v1563
          %v1565 = vrot.slane %v1560, %v1564
          %v1567 = vsel %vm716, %v1548, 0
          %1569 = vmatprep.subr.mxu0 0.0
          %1570 = vmatpush1.msra.mxu0 %v1556
          %1571 = vmatprep.subr.mxu0 0.0
          %1572 = vmatpush1.msra.mxu0 %v1557
          %1573 = vmatprep.subr.mxu0 0.0
          %1574 = vmatpush1.msra.mxu0 %v1558
          %1575 = vmatprep.subr.mxu0 0.0
          %1576 = vmatpush1.msra.mxu0 %v1559
          %1577 = vmatprep.subr.mxu0 0.0
          %1578 = vmatpush1.msra.mxu0 0.0
          %1579 = vmatprep.subr.mxu0 0.0
          %1580 = vmatpush1.msra.mxu0 0.0
          %1581 = vmatprep.subr.mxu0 0.0
          %1582 = vmatpush1.msra.mxu0 0.0
          %1583 = vmatprep.subr.mxu0 0.0
          %1584 = vmatpush1.msra.mxu0 0.0
          %1585 = vmatprep.subr.mxu0 0.0
          %1586 = vmatpush1.msra.mxu0 0.0
          %1587 = vmatprep.subr.mxu0 0.0
          %1588 = vmatpush1.msra.mxu0 0.0
          %1589 = vmatprep.subr.mxu0 0.0
          %1590 = vmatpush1.msra.mxu0 0.0
          %1591 = vmatprep.subr.mxu0 0.0
          %1592 = vmatpush1.msra.mxu0 0.0
          %1593 = vmatprep.subr.mxu0 0.0
          %1594 = vmatpush1.msra.mxu0 0.0
          %1595 = vmatprep.subr.mxu0 0.0
          %1596 = vmatpush1.msra.mxu0 0.0
          %1597 = vmatprep.subr.mxu0 0.0
          %1598 = vmatpush1.msra.mxu0 0.0
          %1599 = vmatprep.subr.mxu0 0.0
          %1600 = vmatpush1.msra.mxu0 0.0
          %1601 = vmatprep.subr.mxu0 0.0
          %1602 = vmatpush1.msra.mxu0 0.0
          %1603 = vmatprep.subr.mxu0 0.0
          %1604 = vmatpush1.msra.mxu0 0.0
          %1605 = vmatprep.subr.mxu0 0.0
          %1606 = vmatpush1.msra.mxu0 0.0
          %1607 = vmatprep.subr.mxu0 0.0
          %1608 = vmatpush1.msra.mxu0 0.0
          %1609 = vmatprep.subr.mxu0 0.0
          %1610 = vmatpush1.msra.mxu0 0.0
          %1611 = vmatprep.subr.mxu0 0.0
          %1612 = vmatpush1.msra.mxu0 0.0
          %1613 = vmatprep.subr.mxu0 0.0
          %1614 = vmatpush1.msra.mxu0 0.0
          %1615 = vmatprep.subr.mxu0 0.0
          %1616 = vmatpush1.msra.mxu0 0.0
          %1617 = vmatprep.subr.mxu0 0.0
          %1618 = vmatpush1.msra.mxu0 0.0
          %1619 = vmatprep.subr.mxu0 0.0
          %1620 = vmatpush1.msra.mxu0 0.0
          %1621 = vmatprep.subr.mxu0 0.0
          %1622 = vmatpush1.msra.mxu0 0.0
          %1623 = vmatprep.subr.mxu0 0.0
          %1624 = vmatpush1.msra.mxu0 0.0
          %1625 = vmatprep.subr.mxu0 0.0
          %1626 = vmatpush1.msra.mxu0 0.0
          %1627 = vmatprep.subr.mxu0 0.0
          %1628 = vmatpush1.msra.mxu0 0.0
          %1629 = vmatprep.subr.mxu0 0.0
          %1630 = vmatpush1.msra.mxu0 0.0
          %1631 = vmatprep.subr.mxu0 0.0
          %1632 = vmatpush1.msra.mxu0 0.0
          %1633 = vmatprep.mubr.f32.mxu0 0.0
          %1634 = vmatmul.mubr.f32.gmra.mrb[0].mxu0 %v1567
          %v1635 = vpop.f32.mrb[0].mxu0
          %v1636 = vadd.f32 %v1565, %v1635
          %v1637 = vpop.f32.mrb[0].mxu0
          %1638 = vdwg.mxu0
          %vm1639 = vcmask 58368
          %1640 = vst.msk [vmem:[#allocation10] sm:$0x3] %vm1639, %v1636
        $region76: #{tpu_custom_call.1} parent=51 // pred_fallthru
          _
        // Predicated region
        $region77: #{tpu_custom_call.1} parent=51 // pred_check
          %p1641 = pneg %p232
        $region78: #{tpu_custom_call.1} parent=51 // pred_check_branch
          %1643 = sbr.rel (%p1641) target = $region80
        $region79: #{tpu_custom_call.1} parent=51 // pred_region
          %s1645 = ssub.s32 32, 32
          %1646 = vsyncadd [#allocation6], %s1645
          %s1648 = sshll.u32 [#allocation10], 4
          %s1649 = int_to_ptr.vmem [resolvable:$true] %s1648
          %1651 = dma.vmem_to_hbm [thread:$0]  %s1649, 32, %s8, [#allocation6]
        $region80: #{tpu_custom_call.1} parent=51 // pred_fallthru
          _
        // Predicated region
        $region81: #{tpu_custom_call.1} parent=51 // pred_check
          %p1652 = pneg %p232
        $region82: #{tpu_custom_call.1} parent=51 // pred_check_branch
          %1654 = sbr.rel (%p1652) target = $region84
        $region83: #{tpu_custom_call.1} parent=51 // pred_region
          %1655 = dma.done [#allocation6], 32
        $region84: #{tpu_custom_call.1} parent=51 // pred_fallthru
          _
      $region52: #{tpu_custom_call.1} parent=5 // pred_fallthru
        _
      %p1656 = scmp.le.s32.totalorder 2, %s21
      // Predicated region
      $region85: #{tpu_custom_call.1} parent=5 // pred_check
        %p1657 = pneg %p1656
      $region86: #{tpu_custom_call.1} parent=5 // pred_check_branch
        %1659 = sbr.rel (%p1657) target = $region88
      $region87: #{tpu_custom_call.1} parent=5 // pred_region
        %s1660 = ssub.s32 %s21, 2
      $region88: #{tpu_custom_call.1} parent=5 // pred_fallthru
        _
    $region6: #{tpu_custom_call.1} parent=1 // loop_footer
      %s25 = sadd.s32 1, %s21
    $region7: #{tpu_custom_call.1} parent=1 // loop_footer_branch
      %20 = sbr.rel target = $region3
    $region8: #{tpu_custom_call.1} parent=1 // loop_exit
      _
    %1661 = vsyncpa [#allocation5], 1
    %s1662 = scalar_lea.sflag [#allocation5], 1
    %1663 = vsyncpa %s1662, 1
    %1664 = vsyncpa [#allocation8], 1
    %s1665 = scalar_lea.sflag [#allocation8], 1
    %1666 = vsyncpa %s1665, 1
    %1667 = vsyncpa [#allocation6], 1
    %s1668 = scalar_lea.sflag [#allocation6], 1
    %1669 = vsyncpa %s1668, 1

</llo_original>
